<compile_context>
chip_gen: v5e
topology: v5e:2x2
jax: 0.10.0
libtpu: 0.0.40
codegen_flags: <defaults>
</compile_context>

<pallas_src>
import jax
import jax.numpy as jnp
from jax.experimental import pallas as pl
from jax.experimental.pallas import tpu as pltpu

# --- small synthetic hyperparameters consistent with the module's forward ---
D_MODEL = 32
NHEAD = 4
HEAD_DIM = D_MODEL // NHEAD
DIM_FF = 64
NUM_LAYERS = 2
SEQ = 8          # includes the prepended global token, as in ClipEncoder
BATCH = 2
EPS = 1e-5       # nn.LayerNorm default


def _layer_norm(x, gamma, beta):
    mu = jnp.mean(x, axis=-1, keepdims=True)
    var = jnp.mean((x - mu) ** 2, axis=-1, keepdims=True)
    return (x - mu) * jax.lax.rsqrt(var + EPS) * gamma + beta


def encoder_stack_kernel(src_ref, pos_ref,
                         wqk_ref, bqk_ref, wv_ref, bv_ref,
                         wo_ref, bo_ref, ln1_ref,
                         w1_ref, b1_ref, w2_ref, b2_ref, ln2_ref,
                         out_ref):
    """Full NUM_LAYERS post-norm encoder stack for one batch element (S, D)."""
    _, S, D = src_ref.shape
    H, dh = NHEAD, HEAD_DIM

    x = src_ref[0]                      # (S, D)
    pos = pos_ref[0]                    # (S, D)

    for l in range(NUM_LAYERS):         # static unroll (2 layers: fine)
        xp = x + pos                    # with_pos_embed: q = k = src + pos

        # --- packed, lane-dense projections ---------------------------------
        # qk: (S, 2D), columns [0, D) are q (pre-scaled by 1/sqrt(dh) at
        # packing time), columns [D, 2D) are k.  v: (S, D) from src (no pos).
        qk = jnp.dot(xp, wqk_ref[l], preferred_element_type=jnp.float32) + bqk_ref[l]
        v = jnp.dot(x, wv_ref[l], preferred_element_type=jnp.float32) + bv_ref[l]

        # Head split on the results (static lane slices, head-leading stack).
        qh = jnp.stack([qk[:, h * dh:(h + 1) * dh] for h in range(H)], axis=0)
        kh = jnp.stack([qk[:, D + h * dh:D + (h + 1) * dh] for h in range(H)], axis=0)
        vh = jnp.stack([v[:, h * dh:(h + 1) * dh] for h in range(H)], axis=0)

        # --- head-batched attention (no padding mask: ClipEncoder mask is
        # all-valid, so every row has live entries) ---------------------------
        scores = jnp.einsum('hqd,hkd->hqk', qh, kh,
                            preferred_element_type=jnp.float32)    # (H, S, S)
        m = jnp.max(scores, axis=-1, keepdims=True)
        e = jnp.exp(scores - m)
        attn = e / jnp.sum(e, axis=-1, keepdims=True)               # exact recip
        ctx = jnp.einsum('hqk,hkd->hqd', attn, vh,
                         preferred_element_type=jnp.float32)        # (H, S, dh)

        # Heads back onto the lane axis (PyTorch head-major concat order),
        # then ONE fused out-projection matmul.
        ctx2d = jnp.concatenate([ctx[h] for h in range(H)], axis=-1)  # (S, D)
        attn_out = jnp.dot(ctx2d, wo_ref[l],
                           preferred_element_type=jnp.float32) + bo_ref[l]

        # --- residual + norm1 (dropout = identity in eval mode) -------------
        ln1 = ln1_ref[l]
        x = _layer_norm(x + attn_out, ln1[0:1, :], ln1[1:2, :])

        # --- FFN: linear1 -> relu -> linear2 ---------------------------------
        h1 = jnp.dot(x, w1_ref[l], preferred_element_type=jnp.float32) + b1_ref[l]
        h1 = jnp.maximum(h1, 0.0)
        ff = jnp.dot(h1, w2_ref[l], preferred_element_type=jnp.float32) + b2_ref[l]

        ln2 = ln2_ref[l]
        x = _layer_norm(x + ff, ln2[0:1, :], ln2[1:2, :])

    out_ref[0] = x


def _full_spec(arr):
    """Whole-array VMEM operand (same block every grid step -> no re-DMA)."""
    n = arr.ndim
    return pl.BlockSpec(arr.shape, lambda b, n=n: (0,) * n)


@jax.jit
def transformer_encoder(src_sbd, pos_sbd, packed_params):
    """TransformerEncoder.forward (norm=None, return_intermediate=False,
    src_mask=None, all-valid key-padding mask) for (S, B, D) seq-first inputs.
    """
    S, B, D = src_sbd.shape
    # Batch-major for the batch grid axis (tiny wrapper-side transpose).
    src_bsd = jnp.transpose(src_sbd, (1, 0, 2))      # (B, S, D)
    pos_bsd = jnp.transpose(pos_sbd, (1, 0, 2))

    tok_spec = pl.BlockSpec((1, S, D), lambda b: (b, 0, 0))
    out_bsd = pl.pallas_call(
        encoder_stack_kernel,
        grid=(B,),
        out_shape=jax.ShapeDtypeStruct((B, S, D), jnp.float32),
        in_specs=[tok_spec, tok_spec] + [_full_spec(p) for p in packed_params],
        out_specs=pl.BlockSpec((1, S, D), lambda b: (b, 0, 0)),
        compiler_params=pltpu.CompilerParams(
            dimension_semantics=("parallel",)),
    )(src_bsd, pos_bsd, *packed_params)
    # TODO(synk): the PyTorch layer also returns per-layer attention weights
    # (attn_weights[:, 0, 1:]); they are unused by ClipEncoder.forward and are
    # not emitted here.
    return jnp.transpose(out_bsd, (1, 0, 2))


# ---------------------------------------------------------------------------
# Parameters: created in PyTorch convention (Linear weights are (out, in),
# applied as x @ W.T; MultiheadAttention packs q/k/v into in_proj_weight of
# shape (3D, D)), then packed once into kernel-friendly stacked slabs.
# ---------------------------------------------------------------------------
def init_torch_style_layer(key):
    ks = jax.random.split(key, 6)

    def w(k, shape, scale=0.1):
        return jax.random.normal(k, shape, jnp.float32) * scale

    return dict(
        in_proj_weight=w(ks[0], (3 * D_MODEL, D_MODEL)),
        in_proj_bias=w(ks[1], (3 * D_MODEL,), 0.02),
        out_proj_weight=w(ks[2], (D_MODEL, D_MODEL)),
        out_proj_bias=jnp.zeros((D_MODEL,), jnp.float32),
        linear1_weight=w(ks[3], (DIM_FF, D_MODEL)),
        linear1_bias=w(ks[4], (DIM_FF,), 0.02),
        linear2_weight=w(ks[5], (D_MODEL, DIM_FF)),
        linear2_bias=jnp.zeros((D_MODEL,), jnp.float32),
        norm1_weight=jnp.ones((D_MODEL,), jnp.float32),
        norm1_bias=jnp.zeros((D_MODEL,), jnp.float32),
        norm2_weight=jnp.ones((D_MODEL,), jnp.float32),
        norm2_bias=jnp.zeros((D_MODEL,), jnp.float32),
    )


def pack_params(layers):
    """One-off conversion PyTorch convention -> stacked kernel slabs.

    * Wqk is (D, 2D) = [Wq.T * 1/sqrt(dh) | Wk.T] so q/k come from one
      lane-dense matmul with the attention scale pre-folded.
    * Wv / Wo / W1 / W2 are stored transposed so the kernel does x @ W.
    """
    D = D_MODEL
    scale = HEAD_DIM ** -0.5
    wqk, bqk, wv, bv, wo, bo, ln1, w1, b1, w2, b2, ln2 = ([] for _ in range(12))
    for p in layers:
        w_in, b_in = p['in_proj_weight'], p['in_proj_bias']
        wqk.append(jnp.concatenate([w_in[:D].T * scale, w_in[D:2 * D].T], axis=1))
        bqk.append(jnp.concatenate([b_in[:D] * scale, b_in[D:2 * D]]).reshape(1, 2 * D))
        wv.append(w_in[2 * D:].T)                                # (D, D)
        bv.append(b_in[2 * D:].reshape(1, D))
        wo.append(p['out_proj_weight'].T)                        # (D, D)
        bo.append(p['out_proj_bias'].reshape(1, D))
        ln1.append(jnp.stack([p['norm1_weight'], p['norm1_bias']]))
        w1.append(p['linear1_weight'].T)                         # (D, FF)
        b1.append(p['linear1_bias'].reshape(1, DIM_FF))
        w2.append(p['linear2_weight'].T)                         # (FF, D)
        b2.append(p['linear2_bias'].reshape(1, D))
        ln2.append(jnp.stack([p['norm2_weight'], p['norm2_bias']]))
    return tuple(jnp.stack(a) for a in
                 (wqk, bqk, wv, bv, wo, bo, ln1, w1, b1, w2, b2, ln2))


def reference_encoder(src, pos, layers):
    """Pure-JAX reference of the PyTorch encoder stack (eval mode)."""
    H, dh = NHEAD, HEAD_DIM
    x = src                                                     # (S, B, D)
    for p in layers:
        xp = x + pos
        w_in, b_in = p['in_proj_weight'], p['in_proj_bias']
        q = jnp.einsum('sbd,ed->sbe', xp, w_in[:D_MODEL]) + b_in[:D_MODEL]
        k = jnp.einsum('sbd,ed->sbe', xp, w_in[D_MODEL:2 * D_MODEL]) + b_in[D_MODEL:2 * D_MODEL]
        v = jnp.einsum('sbd,ed->sbe', x, w_in[2 * D_MODEL:]) + b_in[2 * D_MODEL:]
        q = q * (dh ** -0.5)
        S, B, _ = x.shape
        qh = q.reshape(S, B, H, dh)
        kh = k.reshape(S, B, H, dh)
        vh = v.reshape(S, B, H, dh)
        scores = jnp.einsum('qbhd,kbhd->bhqk', qh, kh)
        attn = jax.nn.softmax(scores, axis=-1)
        ctx = jnp.einsum('bhqk,kbhd->qbhd', attn, vh).reshape(S, B, D_MODEL)
        attn_out = ctx @ p['out_proj_weight'].T + p['out_proj_bias']
        x = _layer_norm(x + attn_out, p['norm1_weight'], p['norm1_bias'])
        h1 = jax.nn.relu(x @ p['linear1_weight'].T + p['linear1_bias'])
        ff = h1 @ p['linear2_weight'].T + p['linear2_bias']
        x = _layer_norm(x + ff, p['norm2_weight'], p['norm2_bias'])
    return x


if __name__ == "__main__":
    root = jax.random.PRNGKey(0)
    k_src, k_pos, k_par = jax.random.split(root, 3)

    # (S, B, D) — seq-first, like the PyTorch module feeds its encoder.
    src = jax.random.normal(k_src, (SEQ, BATCH, D_MODEL), jnp.float32)
    pos = jax.random.normal(k_pos, (SEQ, BATCH, D_MODEL), jnp.float32)

    torch_style = [init_torch_style_layer(k)
                   for k in jax.random.split(k_par, NUM_LAYERS)]
    packed = pack_params(torch_style)

    out = transformer_encoder(src, pos, packed)
    out = jax.block_until_ready(out)

    assert out.shape == (SEQ, BATCH, D_MODEL)
    assert bool(jnp.all(jnp.isfinite(out)))

    # Correctness vs. pure-JAX reference (exact softmax reciprocal, all f32).
    ref = reference_encoder(src, pos, torch_style)
    max_err = float(jnp.max(jnp.abs(out - ref)))
    assert max_err < 1e-4, f"mismatch vs reference: {max_err}"

    print("KERNEL_OK")
</pallas_src>

<mosaic_0001>
module attributes {stable_mosaic.version = 11 : i64} {
  func.func @encoder_stack_kernel(%arg0: i32, %arg1: memref<1x8x32xf32, #tpu.memory_space<vmem>>, %arg2: memref<1x8x32xf32, #tpu.memory_space<vmem>>, %arg3: memref<2x32x64xf32, #tpu.memory_space<vmem>>, %arg4: memref<2x1x64xf32, #tpu.memory_space<vmem>>, %arg5: memref<2x32x32xf32, #tpu.memory_space<vmem>>, %arg6: memref<2x1x32xf32, #tpu.memory_space<vmem>>, %arg7: memref<2x32x32xf32, #tpu.memory_space<vmem>>, %arg8: memref<2x1x32xf32, #tpu.memory_space<vmem>>, %arg9: memref<2x2x32xf32, #tpu.memory_space<vmem>>, %arg10: memref<2x32x64xf32, #tpu.memory_space<vmem>>, %arg11: memref<2x1x64xf32, #tpu.memory_space<vmem>>, %arg12: memref<2x64x32xf32, #tpu.memory_space<vmem>>, %arg13: memref<2x1x32xf32, #tpu.memory_space<vmem>>, %arg14: memref<2x2x32xf32, #tpu.memory_space<vmem>>, %arg15: memref<1x8x32xf32, #tpu.memory_space<vmem>>) attributes {dimension_semantics = [#tpu.dimension_semantics<parallel>], iteration_bounds = array<i64: 2>, scalar_prefetch = 0 : i64, scratch_operands = 0 : i64, tpu.core_type = #tpu.core_type<tc>, window_params = [{transform_indices = @transform_0, window_bounds = array<i64: 1, 8, 32>}, {transform_indices = @transform_1, window_bounds = array<i64: 1, 8, 32>}, {pipeline_mode = #tpu.pipeline_mode<synchronous>, transform_indices = @transform_2, window_bounds = array<i64: 2, 32, 64>}, {pipeline_mode = #tpu.pipeline_mode<synchronous>, transform_indices = @transform_3, window_bounds = array<i64: 2, 1, 64>}, {pipeline_mode = #tpu.pipeline_mode<synchronous>, transform_indices = @transform_4, window_bounds = array<i64: 2, 32, 32>}, {pipeline_mode = #tpu.pipeline_mode<synchronous>, transform_indices = @transform_5, window_bounds = array<i64: 2, 1, 32>}, {pipeline_mode = #tpu.pipeline_mode<synchronous>, transform_indices = @transform_6, window_bounds = array<i64: 2, 32, 32>}, {pipeline_mode = #tpu.pipeline_mode<synchronous>, transform_indices = @transform_7, window_bounds = array<i64: 2, 1, 32>}, {pipeline_mode = #tpu.pipeline_mode<synchronous>, transform_indices = @transform_8, window_bounds = array<i64: 2, 2, 32>}, {pipeline_mode = #tpu.pipeline_mode<synchronous>, transform_indices = @transform_9, window_bounds = array<i64: 2, 32, 64>}, {pipeline_mode = #tpu.pipeline_mode<synchronous>, transform_indices = @transform_10, window_bounds = array<i64: 2, 1, 64>}, {pipeline_mode = #tpu.pipeline_mode<synchronous>, transform_indices = @transform_11, window_bounds = array<i64: 2, 64, 32>}, {pipeline_mode = #tpu.pipeline_mode<synchronous>, transform_indices = @transform_12, window_bounds = array<i64: 2, 1, 32>}, {pipeline_mode = #tpu.pipeline_mode<synchronous>, transform_indices = @transform_13, window_bounds = array<i64: 2, 2, 32>}, {transform_indices = @transform_14, window_bounds = array<i64: 1, 8, 32>}]} {
    %c0 = arith.constant 0 : index
    %c0_0 = arith.constant 0 : index
    %c0_1 = arith.constant 0 : index
    %0 = vector.load %arg1[%c0, %c0_0, %c0_1] : memref<1x8x32xf32, #tpu.memory_space<vmem>>, vector<1x8x32xf32>
    %1 = vector.shape_cast %0 : vector<1x8x32xf32> to vector<8x32xf32>
    %c0_2 = arith.constant 0 : index
    %c0_3 = arith.constant 0 : index
    %c0_4 = arith.constant 0 : index
    %2 = vector.load %arg2[%c0_2, %c0_3, %c0_4] : memref<1x8x32xf32, #tpu.memory_space<vmem>>, vector<1x8x32xf32>
    %3 = vector.shape_cast %2 : vector<1x8x32xf32> to vector<8x32xf32>
    %4 = arith.addf %1, %3 : vector<8x32xf32>
    %c0_5 = arith.constant 0 : index
    %c0_6 = arith.constant 0 : index
    %c0_7 = arith.constant 0 : index
    %5 = vector.load %arg3[%c0_5, %c0_6, %c0_7] : memref<2x32x64xf32, #tpu.memory_space<vmem>>, vector<1x32x64xf32>
    %6 = vector.shape_cast %5 : vector<1x32x64xf32> to vector<32x64xf32>
    %cst = arith.constant dense<0.000000e+00> : vector<8x64xf32>
    %7 = tpu.matmul %4, %6, %cst {dimension_numbers = #tpu.dot_dimension_numbers<[1], [0], [0], [1], [0, 0, 1, 1], [], []>} : vector<8x32xf32>, vector<32x64xf32>, vector<8x64xf32> -> vector<8x64xf32>
    %c0_8 = arith.constant 0 : index
    %c0_9 = arith.constant 0 : index
    %c0_10 = arith.constant 0 : index
    %8 = vector.load %arg4[%c0_8, %c0_9, %c0_10] : memref<2x1x64xf32, #tpu.memory_space<vmem>>, vector<1x1x64xf32>
    %9 = vector.shape_cast %8 : vector<1x1x64xf32> to vector<1x64xf32>
    %10 = vector.broadcast %9 : vector<1x64xf32> to vector<8x64xf32>
    %11 = arith.addf %7, %10 : vector<8x64xf32>
    %c0_11 = arith.constant 0 : index
    %c0_12 = arith.constant 0 : index
    %c0_13 = arith.constant 0 : index
    %12 = vector.load %arg5[%c0_11, %c0_12, %c0_13] : memref<2x32x32xf32, #tpu.memory_space<vmem>>, vector<1x32x32xf32>
    %13 = vector.shape_cast %12 : vector<1x32x32xf32> to vector<32x32xf32>
    %cst_14 = arith.constant dense<0.000000e+00> : vector<8x32xf32>
    %14 = tpu.matmul %1, %13, %cst_14 {dimension_numbers = #tpu.dot_dimension_numbers<[1], [0], [0], [1], [0, 0, 1, 1], [], []>} : vector<8x32xf32>, vector<32x32xf32>, vector<8x32xf32> -> vector<8x32xf32>
    %c0_15 = arith.constant 0 : index
    %c0_16 = arith.constant 0 : index
    %c0_17 = arith.constant 0 : index
    %15 = vector.load %arg6[%c0_15, %c0_16, %c0_17] : memref<2x1x32xf32, #tpu.memory_space<vmem>>, vector<1x1x32xf32>
    %16 = vector.shape_cast %15 : vector<1x1x32xf32> to vector<1x32xf32>
    %17 = vector.broadcast %16 : vector<1x32xf32> to vector<8x32xf32>
    %18 = arith.addf %14, %17 : vector<8x32xf32>
    %19 = vector.extract_strided_slice %11 {offsets = [0, 0], sizes = [8, 8], strides = [1, 1]} : vector<8x64xf32> to vector<8x8xf32>
    %20 = vector.extract_strided_slice %11 {offsets = [0, 8], sizes = [8, 8], strides = [1, 1]} : vector<8x64xf32> to vector<8x8xf32>
    %21 = vector.extract_strided_slice %11 {offsets = [0, 16], sizes = [8, 8], strides = [1, 1]} : vector<8x64xf32> to vector<8x8xf32>
    %22 = vector.extract_strided_slice %11 {offsets = [0, 24], sizes = [8, 8], strides = [1, 1]} : vector<8x64xf32> to vector<8x8xf32>
    %23 = vector.shape_cast %19 : vector<8x8xf32> to vector<1x8x8xf32>
    %24 = vector.shape_cast %20 : vector<8x8xf32> to vector<1x8x8xf32>
    %25 = vector.shape_cast %21 : vector<8x8xf32> to vector<1x8x8xf32>
    %26 = vector.shape_cast %22 : vector<8x8xf32> to vector<1x8x8xf32>
    %27 = tpu.concatenate %23, %24, %25, %26 in 0 : vector<1x8x8xf32>, vector<1x8x8xf32>, vector<1x8x8xf32>, vector<1x8x8xf32> -> vector<4x8x8xf32>
    %28 = vector.extract_strided_slice %11 {offsets = [0, 32], sizes = [8, 8], strides = [1, 1]} : vector<8x64xf32> to vector<8x8xf32>
    %29 = vector.extract_strided_slice %11 {offsets = [0, 40], sizes = [8, 8], strides = [1, 1]} : vector<8x64xf32> to vector<8x8xf32>
    %30 = vector.extract_strided_slice %11 {offsets = [0, 48], sizes = [8, 8], strides = [1, 1]} : vector<8x64xf32> to vector<8x8xf32>
    %31 = vector.extract_strided_slice %11 {offsets = [0, 56], sizes = [8, 8], strides = [1, 1]} : vector<8x64xf32> to vector<8x8xf32>
    %32 = vector.shape_cast %28 : vector<8x8xf32> to vector<1x8x8xf32>
    %33 = vector.shape_cast %29 : vector<8x8xf32> to vector<1x8x8xf32>
    %34 = vector.shape_cast %30 : vector<8x8xf32> to vector<1x8x8xf32>
    %35 = vector.shape_cast %31 : vector<8x8xf32> to vector<1x8x8xf32>
    %36 = tpu.concatenate %32, %33, %34, %35 in 0 : vector<1x8x8xf32>, vector<1x8x8xf32>, vector<1x8x8xf32>, vector<1x8x8xf32> -> vector<4x8x8xf32>
    %37 = vector.extract_strided_slice %18 {offsets = [0, 0], sizes = [8, 8], strides = [1, 1]} : vector<8x32xf32> to vector<8x8xf32>
    %38 = vector.extract_strided_slice %18 {offsets = [0, 8], sizes = [8, 8], strides = [1, 1]} : vector<8x32xf32> to vector<8x8xf32>
    %39 = vector.extract_strided_slice %18 {offsets = [0, 16], sizes = [8, 8], strides = [1, 1]} : vector<8x32xf32> to vector<8x8xf32>
    %40 = vector.extract_strided_slice %18 {offsets = [0, 24], sizes = [8, 8], strides = [1, 1]} : vector<8x32xf32> to vector<8x8xf32>
    %41 = vector.shape_cast %37 : vector<8x8xf32> to vector<1x8x8xf32>
    %42 = vector.shape_cast %38 : vector<8x8xf32> to vector<1x8x8xf32>
    %43 = vector.shape_cast %39 : vector<8x8xf32> to vector<1x8x8xf32>
    %44 = vector.shape_cast %40 : vector<8x8xf32> to vector<1x8x8xf32>
    %45 = tpu.concatenate %41, %42, %43, %44 in 0 : vector<1x8x8xf32>, vector<1x8x8xf32>, vector<1x8x8xf32>, vector<1x8x8xf32> -> vector<4x8x8xf32>
    "tpu.trace_start"() <{level = 10 : i32, message = "hqd,hkd->hqk"}> : () -> ()
    %cst_18 = arith.constant dense<0.000000e+00> : vector<4x8x8xf32>
    %46 = tpu.matmul %27, %36, %cst_18 {dimension_numbers = #tpu.dot_dimension_numbers<[2], [2], [1], [1], [0, 0, 0, 1, 1, 1], [0], [0]>} : vector<4x8x8xf32>, vector<4x8x8xf32>, vector<4x8x8xf32> -> vector<4x8x8xf32>
    "tpu.trace_stop"() : () -> ()
    %cst_19 = arith.constant dense<0xFF800000> : vector<4x8xf32>
    %47 = vector.multi_reduction <maximumf>, %46, %cst_19 [2] : vector<4x8x8xf32> to vector<4x8xf32>
    %48 = vector.shape_cast %47 : vector<4x8xf32> to vector<4x8x1xf32>
    %49 = vector.broadcast %48 : vector<4x8x1xf32> to vector<4x8x8xf32>
    %50 = arith.subf %46, %49 : vector<4x8x8xf32>
    %51 = math.exp %50 : vector<4x8x8xf32>
    %cst_20 = arith.constant dense<0.000000e+00> : vector<4x8xf32>
    %52 = vector.multi_reduction <add>, %51, %cst_20 [2] : vector<4x8x8xf32> to vector<4x8xf32>
    %53 = vector.shape_cast %52 : vector<4x8xf32> to vector<4x8x1xf32>
    %54 = vector.broadcast %53 : vector<4x8x1xf32> to vector<4x8x8xf32>
    %55 = arith.divf %51, %54 : vector<4x8x8xf32>
    "tpu.trace_start"() <{level = 10 : i32, message = "hqk,hkd->hqd"}> : () -> ()
    %cst_21 = arith.constant dense<0.000000e+00> : vector<4x8x8xf32>
    %56 = tpu.matmul %55, %45, %cst_21 {dimension_numbers = #tpu.dot_dimension_numbers<[2], [1], [1], [2], [0, 0, 0, 1, 1, 2], [0], [0]>} : vector<4x8x8xf32>, vector<4x8x8xf32>, vector<4x8x8xf32> -> vector<4x8x8xf32>
    "tpu.trace_stop"() : () -> ()
    %57 = vector.extract_strided_slice %56 {offsets = [0, 0, 0], sizes = [1, 8, 8], strides = [1, 1, 1]} : vector<4x8x8xf32> to vector<1x8x8xf32>
    %58 = vector.shape_cast %57 : vector<1x8x8xf32> to vector<8x8xf32>
    %59 = vector.extract_strided_slice %56 {offsets = [1, 0, 0], sizes = [1, 8, 8], strides = [1, 1, 1]} : vector<4x8x8xf32> to vector<1x8x8xf32>
    %60 = vector.shape_cast %59 : vector<1x8x8xf32> to vector<8x8xf32>
    %61 = vector.extract_strided_slice %56 {offsets = [2, 0, 0], sizes = [1, 8, 8], strides = [1, 1, 1]} : vector<4x8x8xf32> to vector<1x8x8xf32>
    %62 = vector.shape_cast %61 : vector<1x8x8xf32> to vector<8x8xf32>
    %63 = vector.extract_strided_slice %56 {offsets = [3, 0, 0], sizes = [1, 8, 8], strides = [1, 1, 1]} : vector<4x8x8xf32> to vector<1x8x8xf32>
    %64 = vector.shape_cast %63 : vector<1x8x8xf32> to vector<8x8xf32>
    %65 = tpu.concatenate %58, %60, %62, %64 in 1 : vector<8x8xf32>, vector<8x8xf32>, vector<8x8xf32>, vector<8x8xf32> -> vector<8x32xf32>
    %c0_22 = arith.constant 0 : index
    %c0_23 = arith.constant 0 : index
    %c0_24 = arith.constant 0 : index
    %66 = vector.load %arg7[%c0_22, %c0_23, %c0_24] : memref<2x32x32xf32, #tpu.memory_space<vmem>>, vector<1x32x32xf32>
    %67 = vector.shape_cast %66 : vector<1x32x32xf32> to vector<32x32xf32>
    %cst_25 = arith.constant dense<0.000000e+00> : vector<8x32xf32>
    %68 = tpu.matmul %65, %67, %cst_25 {dimension_numbers = #tpu.dot_dimension_numbers<[1], [0], [0], [1], [0, 0, 1, 1], [], []>} : vector<8x32xf32>, vector<32x32xf32>, vector<8x32xf32> -> vector<8x32xf32>
    %c0_26 = arith.constant 0 : index
    %c0_27 = arith.constant 0 : index
    %c0_28 = arith.constant 0 : index
    %69 = vector.load %arg8[%c0_26, %c0_27, %c0_28] : memref<2x1x32xf32, #tpu.memory_space<vmem>>, vector<1x1x32xf32>
    %70 = vector.shape_cast %69 : vector<1x1x32xf32> to vector<1x32xf32>
    %71 = vector.broadcast %70 : vector<1x32xf32> to vector<8x32xf32>
    %72 = arith.addf %68, %71 : vector<8x32xf32>
    %c0_29 = arith.constant 0 : index
    %c0_30 = arith.constant 0 : index
    %c0_31 = arith.constant 0 : index
    %73 = vector.load %arg9[%c0_29, %c0_30, %c0_31] : memref<2x2x32xf32, #tpu.memory_space<vmem>>, vector<1x2x32xf32>
    %74 = vector.shape_cast %73 : vector<1x2x32xf32> to vector<2x32xf32>
    %75 = arith.addf %1, %72 : vector<8x32xf32>
    %76 = vector.extract_strided_slice %74 {offsets = [0, 0], sizes = [1, 32], strides = [1, 1]} : vector<2x32xf32> to vector<1x32xf32>
    %77 = vector.extract_strided_slice %74 {offsets = [1, 0], sizes = [1, 32], strides = [1, 1]} : vector<2x32xf32> to vector<1x32xf32>
    %cst_32 = arith.constant dense<0.000000e+00> : vector<8xf32>
    %78 = vector.multi_reduction <add>, %75, %cst_32 [1] : vector<8x32xf32> to vector<8xf32>
    %79 = vector.shape_cast %78 : vector<8xf32> to vector<8x1xf32>
    %cst_33 = arith.constant 3.200000e+01 : f32
    %80 = vector.broadcast %cst_33 : f32 to vector<8x1xf32>
    %81 = arith.divf %79, %80 : vector<8x1xf32>
    %82 = vector.broadcast %81 : vector<8x1xf32> to vector<8x32xf32>
    %83 = arith.subf %75, %82 : vector<8x32xf32>
    %84 = arith.mulf %83, %83 : vector<8x32xf32>
    %cst_34 = arith.constant dense<0.000000e+00> : vector<8xf32>
    %85 = vector.multi_reduction <add>, %84, %cst_34 [1] : vector<8x32xf32> to vector<8xf32>
    %86 = vector.shape_cast %85 : vector<8xf32> to vector<8x1xf32>
    %cst_35 = arith.constant 3.200000e+01 : f32
    %87 = vector.broadcast %cst_35 : f32 to vector<8x1xf32>
    %88 = arith.divf %86, %87 : vector<8x1xf32>
    %89 = vector.broadcast %81 : vector<8x1xf32> to vector<8x32xf32>
    %90 = arith.subf %75, %89 : vector<8x32xf32>
    %cst_36 = arith.constant 9.99999974E-6 : f32
    %91 = vector.broadcast %cst_36 : f32 to vector<8x1xf32>
    %92 = arith.addf %88, %91 : vector<8x1xf32>
    %93 = math.rsqrt %92 : vector<8x1xf32>
    %94 = vector.broadcast %93 : vector<8x1xf32> to vector<8x32xf32>
    %95 = arith.mulf %90, %94 : vector<8x32xf32>
    %96 = vector.broadcast %76 : vector<1x32xf32> to vector<8x32xf32>
    %97 = arith.mulf %95, %96 : vector<8x32xf32>
    %98 = vector.broadcast %77 : vector<1x32xf32> to vector<8x32xf32>
    %99 = arith.addf %97, %98 : vector<8x32xf32>
    %c0_37 = arith.constant 0 : index
    %c0_38 = arith.constant 0 : index
    %c0_39 = arith.constant 0 : index
    %100 = vector.load %arg10[%c0_37, %c0_38, %c0_39] : memref<2x32x64xf32, #tpu.memory_space<vmem>>, vector<1x32x64xf32>
    %101 = vector.shape_cast %100 : vector<1x32x64xf32> to vector<32x64xf32>
    %cst_40 = arith.constant dense<0.000000e+00> : vector<8x64xf32>
    %102 = tpu.matmul %99, %101, %cst_40 {dimension_numbers = #tpu.dot_dimension_numbers<[1], [0], [0], [1], [0, 0, 1, 1], [], []>} : vector<8x32xf32>, vector<32x64xf32>, vector<8x64xf32> -> vector<8x64xf32>
    %c0_41 = arith.constant 0 : index
    %c0_42 = arith.constant 0 : index
    %c0_43 = arith.constant 0 : index
    %103 = vector.load %arg11[%c0_41, %c0_42, %c0_43] : memref<2x1x64xf32, #tpu.memory_space<vmem>>, vector<1x1x64xf32>
    %104 = vector.shape_cast %103 : vector<1x1x64xf32> to vector<1x64xf32>
    %105 = vector.broadcast %104 : vector<1x64xf32> to vector<8x64xf32>
    %106 = arith.addf %102, %105 : vector<8x64xf32>
    %cst_44 = arith.constant 0.000000e+00 : f32
    %107 = vector.broadcast %cst_44 : f32 to vector<8x64xf32>
    %108 = arith.maximumf %106, %107 : vector<8x64xf32>
    %c0_45 = arith.constant 0 : index
    %c0_46 = arith.constant 0 : index
    %c0_47 = arith.constant 0 : index
    %109 = vector.load %arg12[%c0_45, %c0_46, %c0_47] : memref<2x64x32xf32, #tpu.memory_space<vmem>>, vector<1x64x32xf32>
    %110 = vector.shape_cast %109 : vector<1x64x32xf32> to vector<64x32xf32>
    %cst_48 = arith.constant dense<0.000000e+00> : vector<8x32xf32>
    %111 = tpu.matmul %108, %110, %cst_48 {dimension_numbers = #tpu.dot_dimension_numbers<[1], [0], [0], [1], [0, 0, 1, 1], [], []>} : vector<8x64xf32>, vector<64x32xf32>, vector<8x32xf32> -> vector<8x32xf32>
    %c0_49 = arith.constant 0 : index
    %c0_50 = arith.constant 0 : index
    %c0_51 = arith.constant 0 : index
    %112 = vector.load %arg13[%c0_49, %c0_50, %c0_51] : memref<2x1x32xf32, #tpu.memory_space<vmem>>, vector<1x1x32xf32>
    %113 = vector.shape_cast %112 : vector<1x1x32xf32> to vector<1x32xf32>
    %114 = vector.broadcast %113 : vector<1x32xf32> to vector<8x32xf32>
    %115 = arith.addf %111, %114 : vector<8x32xf32>
    %c0_52 = arith.constant 0 : index
    %c0_53 = arith.constant 0 : index
    %c0_54 = arith.constant 0 : index
    %116 = vector.load %arg14[%c0_52, %c0_53, %c0_54] : memref<2x2x32xf32, #tpu.memory_space<vmem>>, vector<1x2x32xf32>
    %117 = vector.shape_cast %116 : vector<1x2x32xf32> to vector<2x32xf32>
    %118 = arith.addf %99, %115 : vector<8x32xf32>
    %119 = vector.extract_strided_slice %117 {offsets = [0, 0], sizes = [1, 32], strides = [1, 1]} : vector<2x32xf32> to vector<1x32xf32>
    %120 = vector.extract_strided_slice %117 {offsets = [1, 0], sizes = [1, 32], strides = [1, 1]} : vector<2x32xf32> to vector<1x32xf32>
    %cst_55 = arith.constant dense<0.000000e+00> : vector<8xf32>
    %121 = vector.multi_reduction <add>, %118, %cst_55 [1] : vector<8x32xf32> to vector<8xf32>
    %122 = vector.shape_cast %121 : vector<8xf32> to vector<8x1xf32>
    %cst_56 = arith.constant 3.200000e+01 : f32
    %123 = vector.broadcast %cst_56 : f32 to vector<8x1xf32>
    %124 = arith.divf %122, %123 : vector<8x1xf32>
    %125 = vector.broadcast %124 : vector<8x1xf32> to vector<8x32xf32>
    %126 = arith.subf %118, %125 : vector<8x32xf32>
    %127 = arith.mulf %126, %126 : vector<8x32xf32>
    %cst_57 = arith.constant dense<0.000000e+00> : vector<8xf32>
    %128 = vector.multi_reduction <add>, %127, %cst_57 [1] : vector<8x32xf32> to vector<8xf32>
    %129 = vector.shape_cast %128 : vector<8xf32> to vector<8x1xf32>
    %cst_58 = arith.constant 3.200000e+01 : f32
    %130 = vector.broadcast %cst_58 : f32 to vector<8x1xf32>
    %131 = arith.divf %129, %130 : vector<8x1xf32>
    %132 = vector.broadcast %124 : vector<8x1xf32> to vector<8x32xf32>
    %133 = arith.subf %118, %132 : vector<8x32xf32>
    %cst_59 = arith.constant 9.99999974E-6 : f32
    %134 = vector.broadcast %cst_59 : f32 to vector<8x1xf32>
    %135 = arith.addf %131, %134 : vector<8x1xf32>
    %136 = math.rsqrt %135 : vector<8x1xf32>
    %137 = vector.broadcast %136 : vector<8x1xf32> to vector<8x32xf32>
    %138 = arith.mulf %133, %137 : vector<8x32xf32>
    %139 = vector.broadcast %119 : vector<1x32xf32> to vector<8x32xf32>
    %140 = arith.mulf %138, %139 : vector<8x32xf32>
    %141 = vector.broadcast %120 : vector<1x32xf32> to vector<8x32xf32>
    %142 = arith.addf %140, %141 : vector<8x32xf32>
    %143 = arith.addf %142, %3 : vector<8x32xf32>
    %c1 = arith.constant 1 : index
    %c0_60 = arith.constant 0 : index
    %c0_61 = arith.constant 0 : index
    %144 = vector.load %arg3[%c1, %c0_60, %c0_61] : memref<2x32x64xf32, #tpu.memory_space<vmem>>, vector<1x32x64xf32>
    %145 = vector.shape_cast %144 : vector<1x32x64xf32> to vector<32x64xf32>
    %cst_62 = arith.constant dense<0.000000e+00> : vector<8x64xf32>
    %146 = tpu.matmul %143, %145, %cst_62 {dimension_numbers = #tpu.dot_dimension_numbers<[1], [0], [0], [1], [0, 0, 1, 1], [], []>} : vector<8x32xf32>, vector<32x64xf32>, vector<8x64xf32> -> vector<8x64xf32>
    %c1_63 = arith.constant 1 : index
    %c0_64 = arith.constant 0 : index
    %c0_65 = arith.constant 0 : index
    %147 = vector.load %arg4[%c1_63, %c0_64, %c0_65] : memref<2x1x64xf32, #tpu.memory_space<vmem>>, vector<1x1x64xf32>
    %148 = vector.shape_cast %147 : vector<1x1x64xf32> to vector<1x64xf32>
    %149 = vector.broadcast %148 : vector<1x64xf32> to vector<8x64xf32>
    %150 = arith.addf %146, %149 : vector<8x64xf32>
    %c1_66 = arith.constant 1 : index
    %c0_67 = arith.constant 0 : index
    %c0_68 = arith.constant 0 : index
    %151 = vector.load %arg5[%c1_66, %c0_67, %c0_68] : memref<2x32x32xf32, #tpu.memory_space<vmem>>, vector<1x32x32xf32>
    %152 = vector.shape_cast %151 : vector<1x32x32xf32> to vector<32x32xf32>
    %cst_69 = arith.constant dense<0.000000e+00> : vector<8x32xf32>
    %153 = tpu.matmul %142, %152, %cst_69 {dimension_numbers = #tpu.dot_dimension_numbers<[1], [0], [0], [1], [0, 0, 1, 1], [], []>} : vector<8x32xf32>, vector<32x32xf32>, vector<8x32xf32> -> vector<8x32xf32>
    %c1_70 = arith.constant 1 : index
    %c0_71 = arith.constant 0 : index
    %c0_72 = arith.constant 0 : index
    %154 = vector.load %arg6[%c1_70, %c0_71, %c0_72] : memref<2x1x32xf32, #tpu.memory_space<vmem>>, vector<1x1x32xf32>
    %155 = vector.shape_cast %154 : vector<1x1x32xf32> to vector<1x32xf32>
    %156 = vector.broadcast %155 : vector<1x32xf32> to vector<8x32xf32>
    %157 = arith.addf %153, %156 : vector<8x32xf32>
    %158 = vector.extract_strided_slice %150 {offsets = [0, 0], sizes = [8, 8], strides = [1, 1]} : vector<8x64xf32> to vector<8x8xf32>
    %159 = vector.extract_strided_slice %150 {offsets = [0, 8], sizes = [8, 8], strides = [1, 1]} : vector<8x64xf32> to vector<8x8xf32>
    %160 = vector.extract_strided_slice %150 {offsets = [0, 16], sizes = [8, 8], strides = [1, 1]} : vector<8x64xf32> to vector<8x8xf32>
    %161 = vector.extract_strided_slice %150 {offsets = [0, 24], sizes = [8, 8], strides = [1, 1]} : vector<8x64xf32> to vector<8x8xf32>
    %162 = vector.shape_cast %158 : vector<8x8xf32> to vector<1x8x8xf32>
    %163 = vector.shape_cast %159 : vector<8x8xf32> to vector<1x8x8xf32>
    %164 = vector.shape_cast %160 : vector<8x8xf32> to vector<1x8x8xf32>
    %165 = vector.shape_cast %161 : vector<8x8xf32> to vector<1x8x8xf32>
    %166 = tpu.concatenate %162, %163, %164, %165 in 0 : vector<1x8x8xf32>, vector<1x8x8xf32>, vector<1x8x8xf32>, vector<1x8x8xf32> -> vector<4x8x8xf32>
    %167 = vector.extract_strided_slice %150 {offsets = [0, 32], sizes = [8, 8], strides = [1, 1]} : vector<8x64xf32> to vector<8x8xf32>
    %168 = vector.extract_strided_slice %150 {offsets = [0, 40], sizes = [8, 8], strides = [1, 1]} : vector<8x64xf32> to vector<8x8xf32>
    %169 = vector.extract_strided_slice %150 {offsets = [0, 48], sizes = [8, 8], strides = [1, 1]} : vector<8x64xf32> to vector<8x8xf32>
    %170 = vector.extract_strided_slice %150 {offsets = [0, 56], sizes = [8, 8], strides = [1, 1]} : vector<8x64xf32> to vector<8x8xf32>
    %171 = vector.shape_cast %167 : vector<8x8xf32> to vector<1x8x8xf32>
    %172 = vector.shape_cast %168 : vector<8x8xf32> to vector<1x8x8xf32>
    %173 = vector.shape_cast %169 : vector<8x8xf32> to vector<1x8x8xf32>
    %174 = vector.shape_cast %170 : vector<8x8xf32> to vector<1x8x8xf32>
    %175 = tpu.concatenate %171, %172, %173, %174 in 0 : vector<1x8x8xf32>, vector<1x8x8xf32>, vector<1x8x8xf32>, vector<1x8x8xf32> -> vector<4x8x8xf32>
    %176 = vector.extract_strided_slice %157 {offsets = [0, 0], sizes = [8, 8], strides = [1, 1]} : vector<8x32xf32> to vector<8x8xf32>
    %177 = vector.extract_strided_slice %157 {offsets = [0, 8], sizes = [8, 8], strides = [1, 1]} : vector<8x32xf32> to vector<8x8xf32>
    %178 = vector.extract_strided_slice %157 {offsets = [0, 16], sizes = [8, 8], strides = [1, 1]} : vector<8x32xf32> to vector<8x8xf32>
    %179 = vector.extract_strided_slice %157 {offsets = [0, 24], sizes = [8, 8], strides = [1, 1]} : vector<8x32xf32> to vector<8x8xf32>
    %180 = vector.shape_cast %176 : vector<8x8xf32> to vector<1x8x8xf32>
    %181 = vector.shape_cast %177 : vector<8x8xf32> to vector<1x8x8xf32>
    %182 = vector.shape_cast %178 : vector<8x8xf32> to vector<1x8x8xf32>
    %183 = vector.shape_cast %179 : vector<8x8xf32> to vector<1x8x8xf32>
    %184 = tpu.concatenate %180, %181, %182, %183 in 0 : vector<1x8x8xf32>, vector<1x8x8xf32>, vector<1x8x8xf32>, vector<1x8x8xf32> -> vector<4x8x8xf32>
    "tpu.trace_start"() <{level = 10 : i32, message = "hqd,hkd->hqk"}> : () -> ()
    %cst_73 = arith.constant dense<0.000000e+00> : vector<4x8x8xf32>
    %185 = tpu.matmul %166, %175, %cst_73 {dimension_numbers = #tpu.dot_dimension_numbers<[2], [2], [1], [1], [0, 0, 0, 1, 1, 1], [0], [0]>} : vector<4x8x8xf32>, vector<4x8x8xf32>, vector<4x8x8xf32> -> vector<4x8x8xf32>
    "tpu.trace_stop"() : () -> ()
    %cst_74 = arith.constant dense<0xFF800000> : vector<4x8xf32>
    %186 = vector.multi_reduction <maximumf>, %185, %cst_74 [2] : vector<4x8x8xf32> to vector<4x8xf32>
    %187 = vector.shape_cast %186 : vector<4x8xf32> to vector<4x8x1xf32>
    %188 = vector.broadcast %187 : vector<4x8x1xf32> to vector<4x8x8xf32>
    %189 = arith.subf %185, %188 : vector<4x8x8xf32>
    %190 = math.exp %189 : vector<4x8x8xf32>
    %cst_75 = arith.constant dense<0.000000e+00> : vector<4x8xf32>
    %191 = vector.multi_reduction <add>, %190, %cst_75 [2] : vector<4x8x8xf32> to vector<4x8xf32>
    %192 = vector.shape_cast %191 : vector<4x8xf32> to vector<4x8x1xf32>
    %193 = vector.broadcast %192 : vector<4x8x1xf32> to vector<4x8x8xf32>
    %194 = arith.divf %190, %193 : vector<4x8x8xf32>
    "tpu.trace_start"() <{level = 10 : i32, message = "hqk,hkd->hqd"}> : () -> ()
    %cst_76 = arith.constant dense<0.000000e+00> : vector<4x8x8xf32>
    %195 = tpu.matmul %194, %184, %cst_76 {dimension_numbers = #tpu.dot_dimension_numbers<[2], [1], [1], [2], [0, 0, 0, 1, 1, 2], [0], [0]>} : vector<4x8x8xf32>, vector<4x8x8xf32>, vector<4x8x8xf32> -> vector<4x8x8xf32>
    "tpu.trace_stop"() : () -> ()
    %196 = vector.extract_strided_slice %195 {offsets = [0, 0, 0], sizes = [1, 8, 8], strides = [1, 1, 1]} : vector<4x8x8xf32> to vector<1x8x8xf32>
    %197 = vector.shape_cast %196 : vector<1x8x8xf32> to vector<8x8xf32>
    %198 = vector.extract_strided_slice %195 {offsets = [1, 0, 0], sizes = [1, 8, 8], strides = [1, 1, 1]} : vector<4x8x8xf32> to vector<1x8x8xf32>
    %199 = vector.shape_cast %198 : vector<1x8x8xf32> to vector<8x8xf32>
    %200 = vector.extract_strided_slice %195 {offsets = [2, 0, 0], sizes = [1, 8, 8], strides = [1, 1, 1]} : vector<4x8x8xf32> to vector<1x8x8xf32>
    %201 = vector.shape_cast %200 : vector<1x8x8xf32> to vector<8x8xf32>
    %202 = vector.extract_strided_slice %195 {offsets = [3, 0, 0], sizes = [1, 8, 8], strides = [1, 1, 1]} : vector<4x8x8xf32> to vector<1x8x8xf32>
    %203 = vector.shape_cast %202 : vector<1x8x8xf32> to vector<8x8xf32>
    %204 = tpu.concatenate %197, %199, %201, %203 in 1 : vector<8x8xf32>, vector<8x8xf32>, vector<8x8xf32>, vector<8x8xf32> -> vector<8x32xf32>
    %c1_77 = arith.constant 1 : index
    %c0_78 = arith.constant 0 : index
    %c0_79 = arith.constant 0 : index
    %205 = vector.load %arg7[%c1_77, %c0_78, %c0_79] : memref<2x32x32xf32, #tpu.memory_space<vmem>>, vector<1x32x32xf32>
    %206 = vector.shape_cast %205 : vector<1x32x32xf32> to vector<32x32xf32>
    %cst_80 = arith.constant dense<0.000000e+00> : vector<8x32xf32>
    %207 = tpu.matmul %204, %206, %cst_80 {dimension_numbers = #tpu.dot_dimension_numbers<[1], [0], [0], [1], [0, 0, 1, 1], [], []>} : vector<8x32xf32>, vector<32x32xf32>, vector<8x32xf32> -> vector<8x32xf32>
    %c1_81 = arith.constant 1 : index
    %c0_82 = arith.constant 0 : index
    %c0_83 = arith.constant 0 : index
    %208 = vector.load %arg8[%c1_81, %c0_82, %c0_83] : memref<2x1x32xf32, #tpu.memory_space<vmem>>, vector<1x1x32xf32>
    %209 = vector.shape_cast %208 : vector<1x1x32xf32> to vector<1x32xf32>
    %210 = vector.broadcast %209 : vector<1x32xf32> to vector<8x32xf32>
    %211 = arith.addf %207, %210 : vector<8x32xf32>
    %c1_84 = arith.constant 1 : index
    %c0_85 = arith.constant 0 : index
    %c0_86 = arith.constant 0 : index
    %212 = vector.load %arg9[%c1_84, %c0_85, %c0_86] : memref<2x2x32xf32, #tpu.memory_space<vmem>>, vector<1x2x32xf32>
    %213 = vector.shape_cast %212 : vector<1x2x32xf32> to vector<2x32xf32>
    %214 = arith.addf %142, %211 : vector<8x32xf32>
    %215 = vector.extract_strided_slice %213 {offsets = [0, 0], sizes = [1, 32], strides = [1, 1]} : vector<2x32xf32> to vector<1x32xf32>
    %216 = vector.extract_strided_slice %213 {offsets = [1, 0], sizes = [1, 32], strides = [1, 1]} : vector<2x32xf32> to vector<1x32xf32>
    %cst_87 = arith.constant dense<0.000000e+00> : vector<8xf32>
    %217 = vector.multi_reduction <add>, %214, %cst_87 [1] : vector<8x32xf32> to vector<8xf32>
    %218 = vector.shape_cast %217 : vector<8xf32> to vector<8x1xf32>
    %cst_88 = arith.constant 3.200000e+01 : f32
    %219 = vector.broadcast %cst_88 : f32 to vector<8x1xf32>
    %220 = arith.divf %218, %219 : vector<8x1xf32>
    %221 = vector.broadcast %220 : vector<8x1xf32> to vector<8x32xf32>
    %222 = arith.subf %214, %221 : vector<8x32xf32>
    %223 = arith.mulf %222, %222 : vector<8x32xf32>
    %cst_89 = arith.constant dense<0.000000e+00> : vector<8xf32>
    %224 = vector.multi_reduction <add>, %223, %cst_89 [1] : vector<8x32xf32> to vector<8xf32>
    %225 = vector.shape_cast %224 : vector<8xf32> to vector<8x1xf32>
    %cst_90 = arith.constant 3.200000e+01 : f32
    %226 = vector.broadcast %cst_90 : f32 to vector<8x1xf32>
    %227 = arith.divf %225, %226 : vector<8x1xf32>
    %228 = vector.broadcast %220 : vector<8x1xf32> to vector<8x32xf32>
    %229 = arith.subf %214, %228 : vector<8x32xf32>
    %cst_91 = arith.constant 9.99999974E-6 : f32
    %230 = vector.broadcast %cst_91 : f32 to vector<8x1xf32>
    %231 = arith.addf %227, %230 : vector<8x1xf32>
    %232 = math.rsqrt %231 : vector<8x1xf32>
    %233 = vector.broadcast %232 : vector<8x1xf32> to vector<8x32xf32>
    %234 = arith.mulf %229, %233 : vector<8x32xf32>
    %235 = vector.broadcast %215 : vector<1x32xf32> to vector<8x32xf32>
    %236 = arith.mulf %234, %235 : vector<8x32xf32>
    %237 = vector.broadcast %216 : vector<1x32xf32> to vector<8x32xf32>
    %238 = arith.addf %236, %237 : vector<8x32xf32>
    %c1_92 = arith.constant 1 : index
    %c0_93 = arith.constant 0 : index
    %c0_94 = arith.constant 0 : index
    %239 = vector.load %arg10[%c1_92, %c0_93, %c0_94] : memref<2x32x64xf32, #tpu.memory_space<vmem>>, vector<1x32x64xf32>
    %240 = vector.shape_cast %239 : vector<1x32x64xf32> to vector<32x64xf32>
    %cst_95 = arith.constant dense<0.000000e+00> : vector<8x64xf32>
    %241 = tpu.matmul %238, %240, %cst_95 {dimension_numbers = #tpu.dot_dimension_numbers<[1], [0], [0], [1], [0, 0, 1, 1], [], []>} : vector<8x32xf32>, vector<32x64xf32>, vector<8x64xf32> -> vector<8x64xf32>
    %c1_96 = arith.constant 1 : index
    %c0_97 = arith.constant 0 : index
    %c0_98 = arith.constant 0 : index
    %242 = vector.load %arg11[%c1_96, %c0_97, %c0_98] : memref<2x1x64xf32, #tpu.memory_space<vmem>>, vector<1x1x64xf32>
    %243 = vector.shape_cast %242 : vector<1x1x64xf32> to vector<1x64xf32>
    %244 = vector.broadcast %243 : vector<1x64xf32> to vector<8x64xf32>
    %245 = arith.addf %241, %244 : vector<8x64xf32>
    %cst_99 = arith.constant 0.000000e+00 : f32
    %246 = vector.broadcast %cst_99 : f32 to vector<8x64xf32>
    %247 = arith.maximumf %245, %246 : vector<8x64xf32>
    %c1_100 = arith.constant 1 : index
    %c0_101 = arith.constant 0 : index
    %c0_102 = arith.constant 0 : index
    %248 = vector.load %arg12[%c1_100, %c0_101, %c0_102] : memref<2x64x32xf32, #tpu.memory_space<vmem>>, vector<1x64x32xf32>
    %249 = vector.shape_cast %248 : vector<1x64x32xf32> to vector<64x32xf32>
    %cst_103 = arith.constant dense<0.000000e+00> : vector<8x32xf32>
    %250 = tpu.matmul %247, %249, %cst_103 {dimension_numbers = #tpu.dot_dimension_numbers<[1], [0], [0], [1], [0, 0, 1, 1], [], []>} : vector<8x64xf32>, vector<64x32xf32>, vector<8x32xf32> -> vector<8x32xf32>
    %c1_104 = arith.constant 1 : index
    %c0_105 = arith.constant 0 : index
    %c0_106 = arith.constant 0 : index
    %251 = vector.load %arg13[%c1_104, %c0_105, %c0_106] : memref<2x1x32xf32, #tpu.memory_space<vmem>>, vector<1x1x32xf32>
    %252 = vector.shape_cast %251 : vector<1x1x32xf32> to vector<1x32xf32>
    %253 = vector.broadcast %252 : vector<1x32xf32> to vector<8x32xf32>
    %254 = arith.addf %250, %253 : vector<8x32xf32>
    %c1_107 = arith.constant 1 : index
    %c0_108 = arith.constant 0 : index
    %c0_109 = arith.constant 0 : index
    %255 = vector.load %arg14[%c1_107, %c0_108, %c0_109] : memref<2x2x32xf32, #tpu.memory_space<vmem>>, vector<1x2x32xf32>
    %256 = vector.shape_cast %255 : vector<1x2x32xf32> to vector<2x32xf32>
    %257 = arith.addf %238, %254 : vector<8x32xf32>
    %258 = vector.extract_strided_slice %256 {offsets = [0, 0], sizes = [1, 32], strides = [1, 1]} : vector<2x32xf32> to vector<1x32xf32>
    %259 = vector.extract_strided_slice %256 {offsets = [1, 0], sizes = [1, 32], strides = [1, 1]} : vector<2x32xf32> to vector<1x32xf32>
    %cst_110 = arith.constant dense<0.000000e+00> : vector<8xf32>
    %260 = vector.multi_reduction <add>, %257, %cst_110 [1] : vector<8x32xf32> to vector<8xf32>
    %261 = vector.shape_cast %260 : vector<8xf32> to vector<8x1xf32>
    %cst_111 = arith.constant 3.200000e+01 : f32
    %262 = vector.broadcast %cst_111 : f32 to vector<8x1xf32>
    %263 = arith.divf %261, %262 : vector<8x1xf32>
    %264 = vector.broadcast %263 : vector<8x1xf32> to vector<8x32xf32>
    %265 = arith.subf %257, %264 : vector<8x32xf32>
    %266 = arith.mulf %265, %265 : vector<8x32xf32>
    %cst_112 = arith.constant dense<0.000000e+00> : vector<8xf32>
    %267 = vector.multi_reduction <add>, %266, %cst_112 [1] : vector<8x32xf32> to vector<8xf32>
    %268 = vector.shape_cast %267 : vector<8xf32> to vector<8x1xf32>
    %cst_113 = arith.constant 3.200000e+01 : f32
    %269 = vector.broadcast %cst_113 : f32 to vector<8x1xf32>
    %270 = arith.divf %268, %269 : vector<8x1xf32>
    %271 = vector.broadcast %263 : vector<8x1xf32> to vector<8x32xf32>
    %272 = arith.subf %257, %271 : vector<8x32xf32>
    %cst_114 = arith.constant 9.99999974E-6 : f32
    %273 = vector.broadcast %cst_114 : f32 to vector<8x1xf32>
    %274 = arith.addf %270, %273 : vector<8x1xf32>
    %275 = math.rsqrt %274 : vector<8x1xf32>
    %276 = vector.broadcast %275 : vector<8x1xf32> to vector<8x32xf32>
    %277 = arith.mulf %272, %276 : vector<8x32xf32>
    %278 = vector.broadcast %258 : vector<1x32xf32> to vector<8x32xf32>
    %279 = arith.mulf %277, %278 : vector<8x32xf32>
    %280 = vector.broadcast %259 : vector<1x32xf32> to vector<8x32xf32>
    %281 = arith.addf %279, %280 : vector<8x32xf32>
    %c0_115 = arith.constant 0 : index
    %c0_116 = arith.constant 0 : index
    %c0_117 = arith.constant 0 : index
    %282 = vector.load %arg15[%c0_115, %c0_116, %c0_117] : memref<1x8x32xf32, #tpu.memory_space<vmem>>, vector<1x8x32xf32>
    %283 = vector.shape_cast %282 : vector<1x8x32xf32> to vector<8x32xf32>
    %284 = vector.shape_cast %281 : vector<8x32xf32> to vector<1x8x32xf32>
    tpu.vector_store %arg15[%c0_115, %c0_116, %c0_117], %284 {strides = array<i32>} : memref<1x8x32xf32, #tpu.memory_space<vmem>>, vector<1x8x32xf32>,
    return
  }
  func.func @transform_0(%arg0: i32) -> (i32, i32, i32) {
    %c0_i32 = arith.constant 0 : i32
    %c0_i32_0 = arith.constant 0 : i32
    %c0_i32_1 = arith.constant 0 : i32
    return %arg0, %c0_i32, %c0_i32_0 : i32, i32, i32
  }
  func.func @transform_1(%arg0: i32) -> (i32, i32, i32) {
    %c0_i32 = arith.constant 0 : i32
    %c0_i32_0 = arith.constant 0 : i32
    %c0_i32_1 = arith.constant 0 : i32
    return %arg0, %c0_i32, %c0_i32_0 : i32, i32, i32
  }
  func.func @transform_2(%arg0: i32) -> (i32, i32, i32) {
    %c0_i32 = arith.constant 0 : i32
    %c0_i32_0 = arith.constant 0 : i32
    %c0_i32_1 = arith.constant 0 : i32
    %c0_i32_2 = arith.constant 0 : i32
    return %c0_i32, %c0_i32_0, %c0_i32_1 : i32, i32, i32
  }
  func.func @transform_3(%arg0: i32) -> (i32, i32, i32) {
    %c0_i32 = arith.constant 0 : i32
    %c0_i32_0 = arith.constant 0 : i32
    %c0_i32_1 = arith.constant 0 : i32
    %c0_i32_2 = arith.constant 0 : i32
    return %c0_i32, %c0_i32_0, %c0_i32_1 : i32, i32, i32
  }
  func.func @transform_4(%arg0: i32) -> (i32, i32, i32) {
    %c0_i32 = arith.constant 0 : i32
    %c0_i32_0 = arith.constant 0 : i32
    %c0_i32_1 = arith.constant 0 : i32
    %c0_i32_2 = arith.constant 0 : i32
    return %c0_i32, %c0_i32_0, %c0_i32_1 : i32, i32, i32
  }
  func.func @transform_5(%arg0: i32) -> (i32, i32, i32) {
    %c0_i32 = arith.constant 0 : i32
    %c0_i32_0 = arith.constant 0 : i32
    %c0_i32_1 = arith.constant 0 : i32
    %c0_i32_2 = arith.constant 0 : i32
    return %c0_i32, %c0_i32_0, %c0_i32_1 : i32, i32, i32
  }
  func.func @transform_6(%arg0: i32) -> (i32, i32, i32) {
    %c0_i32 = arith.constant 0 : i32
    %c0_i32_0 = arith.constant 0 : i32
    %c0_i32_1 = arith.constant 0 : i32
    %c0_i32_2 = arith.constant 0 : i32
    return %c0_i32, %c0_i32_0, %c0_i32_1 : i32, i32, i32
  }
  func.func @transform_7(%arg0: i32) -> (i32, i32, i32) {
    %c0_i32 = arith.constant 0 : i32
    %c0_i32_0 = arith.constant 0 : i32
    %c0_i32_1 = arith.constant 0 : i32
    %c0_i32_2 = arith.constant 0 : i32
    return %c0_i32, %c0_i32_0, %c0_i32_1 : i32, i32, i32
  }
  func.func @transform_8(%arg0: i32) -> (i32, i32, i32) {
    %c0_i32 = arith.constant 0 : i32
    %c0_i32_0 = arith.constant 0 : i32
    %c0_i32_1 = arith.constant 0 : i32
    %c0_i32_2 = arith.constant 0 : i32
    return %c0_i32, %c0_i32_0, %c0_i32_1 : i32, i32, i32
  }
  func.func @transform_9(%arg0: i32) -> (i32, i32, i32) {
    %c0_i32 = arith.constant 0 : i32
    %c0_i32_0 = arith.constant 0 : i32
    %c0_i32_1 = arith.constant 0 : i32
    %c0_i32_2 = arith.constant 0 : i32
    return %c0_i32, %c0_i32_0, %c0_i32_1 : i32, i32, i32
  }
  func.func @transform_10(%arg0: i32) -> (i32, i32, i32) {
    %c0_i32 = arith.constant 0 : i32
    %c0_i32_0 = arith.constant 0 : i32
    %c0_i32_1 = arith.constant 0 : i32
    %c0_i32_2 = arith.constant 0 : i32
    return %c0_i32, %c0_i32_0, %c0_i32_1 : i32, i32, i32
  }
  func.func @transform_11(%arg0: i32) -> (i32, i32, i32) {
    %c0_i32 = arith.constant 0 : i32
    %c0_i32_0 = arith.constant 0 : i32
    %c0_i32_1 = arith.constant 0 : i32
    %c0_i32_2 = arith.constant 0 : i32
    return %c0_i32, %c0_i32_0, %c0_i32_1 : i32, i32, i32
  }
  func.func @transform_12(%arg0: i32) -> (i32, i32, i32) {
    %c0_i32 = arith.constant 0 : i32
    %c0_i32_0 = arith.constant 0 : i32
    %c0_i32_1 = arith.constant 0 : i32
    %c0_i32_2 = arith.constant 0 : i32
    return %c0_i32, %c0_i32_0, %c0_i32_1 : i32, i32, i32
  }
  func.func @transform_13(%arg0: i32) -> (i32, i32, i32) {
    %c0_i32 = arith.constant 0 : i32
    %c0_i32_0 = arith.constant 0 : i32
    %c0_i32_1 = arith.constant 0 : i32
    %c0_i32_2 = arith.constant 0 : i32
    return %c0_i32, %c0_i32_0, %c0_i32_1 : i32, i32, i32
  }
  func.func @transform_14(%arg0: i32) -> (i32, i32, i32) {
    %c0_i32 = arith.constant 0 : i32
    %c0_i32_0 = arith.constant 0 : i32
    %c0_i32_1 = arith.constant 0 : i32
    return %arg0, %c0_i32, %c0_i32_0 : i32, i32, i32
  }
}

</mosaic_0001>

<llo_original>
// kernel: transformer_encoder.1
$region0: #{transformer_encoder.1}
  #allocation0 [shape = 'u32[]', space=smem, size = 0x4, offset = 0x4, fixed_abs, tag = 'smem constant byte address 0x4 - core index']
  #allocation1 [shape = 'u32[72,128]{1,0:T(1,128)}', space=vmem, size = 0x9000, scoped, tag = 'internal scratch']
  %s0 = inlined_call_operand.vmem [shape: f32[2,8,32], index: 0, kind: input, shape index: {}]
  %s1 = inlined_call_operand.vmem [shape: f32[2,8,32], index: 1, kind: input, shape index: {}]
  %s2 = inlined_call_operand.vmem [shape: f32[2,32,64], index: 2, kind: input, shape index: {}]
  %s3 = inlined_call_operand.vmem [shape: f32[2,1,64], index: 3, kind: input, shape index: {}]
  %s4 = inlined_call_operand.vmem [shape: f32[2,32,32], index: 4, kind: input, shape index: {}]
  %s5 = inlined_call_operand.hbm [shape: f32[2,1,32], index: 5, kind: input, shape index: {}]
  %s6 = inlined_call_operand.vmem [shape: f32[2,32,32], index: 6, kind: input, shape index: {}]
  %s7 = inlined_call_operand.hbm [shape: f32[2,1,32], index: 7, kind: input, shape index: {}]
  %s8 = inlined_call_operand.vmem [shape: f32[2,2,32], index: 8, kind: input, shape index: {}]
  %s9 = inlined_call_operand.hbm [shape: f32[2,32,64], index: 9, kind: input, shape index: {}]
  %s10 = inlined_call_operand.hbm [shape: f32[2,1,64], index: 10, kind: input, shape index: {}]
  %s11 = inlined_call_operand.vmem [shape: f32[2,64,32], index: 11, kind: input, shape index: {}]
  %s12 = inlined_call_operand.hbm [shape: f32[2,1,32], index: 12, kind: input, shape index: {}]
  %s13 = inlined_call_operand.vmem [shape: f32[2,2,32], index: 13, kind: input, shape index: {}]
  %s14 = inlined_call_operand.vmem [shape: f32[2,8,32], index: 14, kind: output, shape index: {}]
  %s15 = sld [smem:[#allocation0]]
  $region109: #{transformer_encoder.1} parent=0
    _
  %s17 = ssub.s32 1, %s15
  %s18 = scalar_select 0, %s17, %s15
  $region1: #{transformer_encoder.1} parent=0
    #allocation2 [shape = 'u8[1024]{0}', space=vmem, size = 0x400, scoped, tag = 'input window, operand 5, single buffered']
    #allocation3 [shape = 's32[2]{0}', space=sflag, size = 0x8, scoped, tag = 'scoped memory for transformer_encoder.1']
    #allocation4 [shape = 'u8[1024]{0}', space=vmem, size = 0x400, scoped, tag = 'input window, operand 7, single buffered']
    #allocation5 [shape = 's32[1]{0}', space=sflag, size = 0x4, scoped, tag = 'scoped memory for transformer_encoder.1']
    #allocation6 [shape = 'u8[32768]{0}', space=vmem, size = 0x8000, scoped, tag = 'input window, operand 9, single buffered']
    #allocation7 [shape = 'u8[1024]{0}', space=vmem, size = 0x400, scoped, tag = 'input window, operand 10, single buffered']
    #allocation8 [shape = 's32[1]{0}', space=sflag, size = 0x4, scoped, tag = 'scoped memory for transformer_encoder.1']
    #allocation9 [shape = 'u8[1024]{0}', space=vmem, size = 0x400, scoped, tag = 'input window, operand 12, single buffered']
    %19 = vsyncpa [#allocation3], 0
    %20 = vsyncpa [#allocation5], 0
    %21 = vsyncpa [#allocation8], 0
    loop: start=0, step=1, limit=4
    $region2: #{transformer_encoder.1} parent=1 // loop_pre_header
      _
    $region3: #{transformer_encoder.1} parent=1 // loop_header
      %s23 = sphi 0, %s27
      %p24 = scmp.ge.s32.totalorder %s23, 4
      %s33 = sphi 0, %s35
      %s36 = sphi 0, %s33
      %s37 = sphi 0, %s36
      %s53 = sphi 0, %s37
      %s59 = sphi 0, %s61
      %s62 = sphi 0, %s59
      %s63 = sphi 0, %s62
      %s79 = sphi 0, %s63
      %s83 = sphi 0, %s83
      %s85 = sphi 0, %s83
      %s86 = sphi 0, %s85
      %s100 = sphi 0, %s86
      %s104 = sphi 0, %s104
      %s106 = sphi 0, %s104
      %s107 = sphi 0, %s106
      %s121 = sphi 0, %s107
      %s125 = sphi 0, %s125
      %s127 = sphi 0, %s125
      %s128 = sphi 0, %s127
      %s142 = sphi 0, %s128
      %s146 = sphi 0, %s146
      %s148 = sphi 0, %s146
      %s149 = sphi 0, %s148
      %s163 = sphi 0, %s149
      %s167 = sphi 0, %s167
      %s169 = sphi 0, %s167
      %s170 = sphi 0, %s169
      %s184 = sphi 0, %s170
      %s188 = sphi 0, %s188
      %s190 = sphi 0, %s188
      %s191 = sphi 0, %s190
      %s205 = sphi 0, %s191
      %s209 = sphi 0, %s209
      %s211 = sphi 0, %s209
      %s212 = sphi 0, %s211
      %s226 = sphi 0, %s212
      %s230 = sphi 0, %s230
      %s232 = sphi 0, %s230
      %s233 = sphi 0, %s232
      %s247 = sphi 0, %s233
      %s251 = sphi 0, %s251
      %s253 = sphi 0, %s251
      %s254 = sphi 0, %s253
      %s268 = sphi 0, %s254
      %s272 = sphi 0, %s272
      %s274 = sphi 0, %s272
      %s275 = sphi 0, %s274
      %s289 = sphi 0, %s275
      %s293 = sphi 0, %s293
      %s295 = sphi 0, %s293
      %s296 = sphi 0, %s295
      %s310 = sphi 0, %s296
      %s314 = sphi 0, %s314
      %s316 = sphi 0, %s314
      %s317 = sphi 0, %s316
      %s331 = sphi 0, %s317
      %s337 = sphi 0, %s339
      %s340 = sphi 0, %s337
      %s341 = sphi 0, %s340
      %s357 = sphi 0, %s341
    $region4: #{transformer_encoder.1} parent=1 // loop_header_branch
      %26 = sbr.rel (%p24) target = $region8
    $region5: #{transformer_encoder.1} parent=1 // loop_body
      %s28 = ssub.s32 %s23, 1
      %s29 = ssub.s32 %s23, 2
      %s30 = sadd.s32 %s23, 1
      %s31 = ssub.s32 %s23, %s30
      %p32 = scmp.eq.s32.totalorder %s31, 0
      %s34 = sadd.s32 %s33, 1
      %s35 = scalar_select %p32, %s33, %s34
      %p38 = pneg %p32
      %p39 = scmp.eq.s32.totalorder %s23, 1
      %p40 = por %p38, %p39
      %p41 = scmp.ne.s32.totalorder %s33, %s36
      %p42 = scmp.eq.s32.totalorder %s23, 0
      %p43 = por %p41, %p42
      %p44 = scmp.ne.s32.totalorder %s33, %s36
      %p45 = scmp.eq.s32.totalorder %s28, 1
      %p46 = por %p44, %p45
      %p47 = scmp.ne.s32.totalorder %s36, %s37
      %p48 = scmp.eq.s32.totalorder %s28, 0
      %p49 = por %p47, %p48
      %p50 = scmp.ne.s32.totalorder %s36, %s37
      %p51 = scmp.eq.s32.totalorder %s29, 1
      %p52 = por %p50, %p51
      %p54 = scmp.ne.s32.totalorder %s37, %s53
      %p55 = scmp.eq.s32.totalorder %s29, 0
      %p56 = por %p54, %p55
      %s57 = ssub.s32 %s23, %s30
      %p58 = scmp.eq.s32.totalorder %s57, 0
      %s60 = sadd.s32 %s59, 1
      %s61 = scalar_select %p58, %s59, %s60
      %p64 = pneg %p58
      %p65 = scmp.eq.s32.totalorder %s23, 1
      %p66 = por %p64, %p65
      %p67 = scmp.ne.s32.totalorder %s59, %s62
      %p68 = scmp.eq.s32.totalorder %s23, 0
      %p69 = por %p67, %p68
      %p70 = scmp.ne.s32.totalorder %s59, %s62
      %p71 = scmp.eq.s32.totalorder %s28, 1
      %p72 = por %p70, %p71
      %p73 = scmp.ne.s32.totalorder %s62, %s63
      %p74 = scmp.eq.s32.totalorder %s28, 0
      %p75 = por %p73, %p74
      %p76 = scmp.ne.s32.totalorder %s62, %s63
      %p77 = scmp.eq.s32.totalorder %s29, 1
      %p78 = por %p76, %p77
      %p80 = scmp.ne.s32.totalorder %s63, %s79
      %p81 = scmp.eq.s32.totalorder %s29, 0
      %p82 = por %p80, %p81
      %s84 = sadd.s32 %s83, 1
      %p87 = scmp.eq.s32.totalorder %s23, 1
      %p88 = scmp.ne.s32.totalorder %s83, %s85
      %p89 = scmp.eq.s32.totalorder %s23, 0
      %p90 = por %p88, %p89
      %p91 = scmp.ne.s32.totalorder %s83, %s85
      %p92 = scmp.eq.s32.totalorder %s28, 1
      %p93 = por %p91, %p92
      %p94 = scmp.ne.s32.totalorder %s85, %s86
      %p95 = scmp.eq.s32.totalorder %s28, 0
      %p96 = por %p94, %p95
      %p97 = scmp.ne.s32.totalorder %s85, %s86
      %p98 = scmp.eq.s32.totalorder %s29, 1
      %p99 = por %p97, %p98
      %p101 = scmp.ne.s32.totalorder %s86, %s100
      %p102 = scmp.eq.s32.totalorder %s29, 0
      %p103 = por %p101, %p102
      %s105 = sadd.s32 %s104, 1
      %p108 = scmp.eq.s32.totalorder %s23, 1
      %p109 = scmp.ne.s32.totalorder %s104, %s106
      %p110 = scmp.eq.s32.totalorder %s23, 0
      %p111 = por %p109, %p110
      %p112 = scmp.ne.s32.totalorder %s104, %s106
      %p113 = scmp.eq.s32.totalorder %s28, 1
      %p114 = por %p112, %p113
      %p115 = scmp.ne.s32.totalorder %s106, %s107
      %p116 = scmp.eq.s32.totalorder %s28, 0
      %p117 = por %p115, %p116
      %p118 = scmp.ne.s32.totalorder %s106, %s107
      %p119 = scmp.eq.s32.totalorder %s29, 1
      %p120 = por %p118, %p119
      %p122 = scmp.ne.s32.totalorder %s107, %s121
      %p123 = scmp.eq.s32.totalorder %s29, 0
      %p124 = por %p122, %p123
      %s126 = sadd.s32 %s125, 1
      %p129 = scmp.eq.s32.totalorder %s23, 1
      %p130 = scmp.ne.s32.totalorder %s125, %s127
      %p131 = scmp.eq.s32.totalorder %s23, 0
      %p132 = por %p130, %p131
      %p133 = scmp.ne.s32.totalorder %s125, %s127
      %p134 = scmp.eq.s32.totalorder %s28, 1
      %p135 = por %p133, %p134
      %p136 = scmp.ne.s32.totalorder %s127, %s128
      %p137 = scmp.eq.s32.totalorder %s28, 0
      %p138 = por %p136, %p137
      %p139 = scmp.ne.s32.totalorder %s127, %s128
      %p140 = scmp.eq.s32.totalorder %s29, 1
      %p141 = por %p139, %p140
      %p143 = scmp.ne.s32.totalorder %s128, %s142
      %p144 = scmp.eq.s32.totalorder %s29, 0
      %p145 = por %p143, %p144
      %s147 = sadd.s32 %s146, 1
      %p150 = scmp.eq.s32.totalorder %s23, 1
      %p151 = scmp.ne.s32.totalorder %s146, %s148
      %p152 = scmp.eq.s32.totalorder %s23, 0
      %p153 = por %p151, %p152
      %p154 = scmp.ne.s32.totalorder %s146, %s148
      %p155 = scmp.eq.s32.totalorder %s28, 1
      %p156 = por %p154, %p155
      %p157 = scmp.ne.s32.totalorder %s148, %s149
      %p158 = scmp.eq.s32.totalorder %s28, 0
      %p159 = por %p157, %p158
      %p160 = scmp.ne.s32.totalorder %s148, %s149
      %p161 = scmp.eq.s32.totalorder %s29, 1
      %p162 = por %p160, %p161
      %p164 = scmp.ne.s32.totalorder %s149, %s163
      %p165 = scmp.eq.s32.totalorder %s29, 0
      %p166 = por %p164, %p165
      %s168 = sadd.s32 %s167, 1
      %p171 = scmp.eq.s32.totalorder %s23, 1
      %p172 = scmp.ne.s32.totalorder %s167, %s169
      %p173 = scmp.eq.s32.totalorder %s23, 0
      %p174 = por %p172, %p173
      %p175 = scmp.ne.s32.totalorder %s167, %s169
      %p176 = scmp.eq.s32.totalorder %s28, 1
      %p177 = por %p175, %p176
      %p178 = scmp.ne.s32.totalorder %s169, %s170
      %p179 = scmp.eq.s32.totalorder %s28, 0
      %p180 = por %p178, %p179
      %p181 = scmp.ne.s32.totalorder %s169, %s170
      %p182 = scmp.eq.s32.totalorder %s29, 1
      %p183 = por %p181, %p182
      %p185 = scmp.ne.s32.totalorder %s170, %s184
      %p186 = scmp.eq.s32.totalorder %s29, 0
      %p187 = por %p185, %p186
      %s189 = sadd.s32 %s188, 1
      %p192 = scmp.eq.s32.totalorder %s23, 1
      %p193 = scmp.ne.s32.totalorder %s188, %s190
      %p194 = scmp.eq.s32.totalorder %s23, 0
      %p195 = por %p193, %p194
      %p196 = scmp.ne.s32.totalorder %s188, %s190
      %p197 = scmp.eq.s32.totalorder %s28, 1
      %p198 = por %p196, %p197
      %p199 = scmp.ne.s32.totalorder %s190, %s191
      %p200 = scmp.eq.s32.totalorder %s28, 0
      %p201 = por %p199, %p200
      %p202 = scmp.ne.s32.totalorder %s190, %s191
      %p203 = scmp.eq.s32.totalorder %s29, 1
      %p204 = por %p202, %p203
      %p206 = scmp.ne.s32.totalorder %s191, %s205
      %p207 = scmp.eq.s32.totalorder %s29, 0
      %p208 = por %p206, %p207
      %s210 = sadd.s32 %s209, 1
      %p213 = scmp.eq.s32.totalorder %s23, 1
      %p214 = scmp.ne.s32.totalorder %s209, %s211
      %p215 = scmp.eq.s32.totalorder %s23, 0
      %p216 = por %p214, %p215
      %p217 = scmp.ne.s32.totalorder %s209, %s211
      %p218 = scmp.eq.s32.totalorder %s28, 1
      %p219 = por %p217, %p218
      %p220 = scmp.ne.s32.totalorder %s211, %s212
      %p221 = scmp.eq.s32.totalorder %s28, 0
      %p222 = por %p220, %p221
      %p223 = scmp.ne.s32.totalorder %s211, %s212
      %p224 = scmp.eq.s32.totalorder %s29, 1
      %p225 = por %p223, %p224
      %p227 = scmp.ne.s32.totalorder %s212, %s226
      %p228 = scmp.eq.s32.totalorder %s29, 0
      %p229 = por %p227, %p228
      %s231 = sadd.s32 %s230, 1
      %p234 = scmp.eq.s32.totalorder %s23, 1
      %p235 = scmp.ne.s32.totalorder %s230, %s232
      %p236 = scmp.eq.s32.totalorder %s23, 0
      %p237 = por %p235, %p236
      %p238 = scmp.ne.s32.totalorder %s230, %s232
      %p239 = scmp.eq.s32.totalorder %s28, 1
      %p240 = por %p238, %p239
      %p241 = scmp.ne.s32.totalorder %s232, %s233
      %p242 = scmp.eq.s32.totalorder %s28, 0
      %p243 = por %p241, %p242
      %p244 = scmp.ne.s32.totalorder %s232, %s233
      %p245 = scmp.eq.s32.totalorder %s29, 1
      %p246 = por %p244, %p245
      %p248 = scmp.ne.s32.totalorder %s233, %s247
      %p249 = scmp.eq.s32.totalorder %s29, 0
      %p250 = por %p248, %p249
      %s252 = sadd.s32 %s251, 1
      %p255 = scmp.eq.s32.totalorder %s23, 1
      %p256 = scmp.ne.s32.totalorder %s251, %s253
      %p257 = scmp.eq.s32.totalorder %s23, 0
      %p258 = por %p256, %p257
      %p259 = scmp.ne.s32.totalorder %s251, %s253
      %p260 = scmp.eq.s32.totalorder %s28, 1
      %p261 = por %p259, %p260
      %p262 = scmp.ne.s32.totalorder %s253, %s254
      %p263 = scmp.eq.s32.totalorder %s28, 0
      %p264 = por %p262, %p263
      %p265 = scmp.ne.s32.totalorder %s253, %s254
      %p266 = scmp.eq.s32.totalorder %s29, 1
      %p267 = por %p265, %p266
      %p269 = scmp.ne.s32.totalorder %s254, %s268
      %p270 = scmp.eq.s32.totalorder %s29, 0
      %p271 = por %p269, %p270
      %s273 = sadd.s32 %s272, 1
      %p276 = scmp.eq.s32.totalorder %s23, 1
      %p277 = scmp.ne.s32.totalorder %s272, %s274
      %p278 = scmp.eq.s32.totalorder %s23, 0
      %p279 = por %p277, %p278
      %p280 = scmp.ne.s32.totalorder %s272, %s274
      %p281 = scmp.eq.s32.totalorder %s28, 1
      %p282 = por %p280, %p281
      %p283 = scmp.ne.s32.totalorder %s274, %s275
      %p284 = scmp.eq.s32.totalorder %s28, 0
      %p285 = por %p283, %p284
      %p286 = scmp.ne.s32.totalorder %s274, %s275
      %p287 = scmp.eq.s32.totalorder %s29, 1
      %p288 = por %p286, %p287
      %p290 = scmp.ne.s32.totalorder %s275, %s289
      %p291 = scmp.eq.s32.totalorder %s29, 0
      %p292 = por %p290, %p291
      %s294 = sadd.s32 %s293, 1
      %p297 = scmp.eq.s32.totalorder %s23, 1
      %p298 = scmp.ne.s32.totalorder %s293, %s295
      %p299 = scmp.eq.s32.totalorder %s23, 0
      %p300 = por %p298, %p299
      %p301 = scmp.ne.s32.totalorder %s293, %s295
      %p302 = scmp.eq.s32.totalorder %s28, 1
      %p303 = por %p301, %p302
      %p304 = scmp.ne.s32.totalorder %s295, %s296
      %p305 = scmp.eq.s32.totalorder %s28, 0
      %p306 = por %p304, %p305
      %p307 = scmp.ne.s32.totalorder %s295, %s296
      %p308 = scmp.eq.s32.totalorder %s29, 1
      %p309 = por %p307, %p308
      %p311 = scmp.ne.s32.totalorder %s296, %s310
      %p312 = scmp.eq.s32.totalorder %s29, 0
      %p313 = por %p311, %p312
      %s315 = sadd.s32 %s314, 1
      %p318 = scmp.eq.s32.totalorder %s23, 1
      %p319 = scmp.ne.s32.totalorder %s314, %s316
      %p320 = scmp.eq.s32.totalorder %s23, 0
      %p321 = por %p319, %p320
      %p322 = scmp.ne.s32.totalorder %s314, %s316
      %p323 = scmp.eq.s32.totalorder %s28, 1
      %p324 = por %p322, %p323
      %p325 = scmp.ne.s32.totalorder %s316, %s317
      %p326 = scmp.eq.s32.totalorder %s28, 0
      %p327 = por %p325, %p326
      %p328 = scmp.ne.s32.totalorder %s316, %s317
      %p329 = scmp.eq.s32.totalorder %s29, 1
      %p330 = por %p328, %p329
      %p332 = scmp.ne.s32.totalorder %s317, %s331
      %p333 = scmp.eq.s32.totalorder %s29, 0
      %p334 = por %p332, %p333
      %s335 = ssub.s32 %s23, %s30
      %p336 = scmp.eq.s32.totalorder %s335, 0
      %s338 = sadd.s32 %s337, 1
      %s339 = scalar_select %p336, %s337, %s338
      %p342 = pneg %p336
      %p343 = scmp.eq.s32.totalorder %s23, 1
      %p344 = por %p342, %p343
      %p345 = scmp.ne.s32.totalorder %s337, %s340
      %p346 = scmp.eq.s32.totalorder %s23, 0
      %p347 = por %p345, %p346
      %p348 = scmp.ne.s32.totalorder %s337, %s340
      %p349 = scmp.eq.s32.totalorder %s28, 1
      %p350 = por %p348, %p349
      %p351 = scmp.ne.s32.totalorder %s340, %s341
      %p352 = scmp.eq.s32.totalorder %s28, 0
      %p353 = por %p351, %p352
      %p354 = scmp.ne.s32.totalorder %s340, %s341
      %p355 = scmp.eq.s32.totalorder %s29, 1
      %p356 = por %p354, %p355
      %p358 = scmp.ne.s32.totalorder %s341, %s357
      %p359 = scmp.eq.s32.totalorder %s29, 0
      %p360 = por %p358, %p359
      %p361 = scmp.le.s32.totalorder 1, %s23
      %p362 = scmp.lt.s32.totalorder %s23, 3
      %p363 = pnand %p361, %p362
      %p364 = pneg %p363
      // Predicated region
      $region9: #{transformer_encoder.1} parent=5 // pred_check
        _
      $region10: #{transformer_encoder.1} parent=5 // pred_check_branch
        %366 = sbr.rel (%p363) target = $region12
      $region11: #{transformer_encoder.1} parent=5 // pred_region
        %s367 = ssub.s32 %s23, 1
        // Predicated region
        $region13: #{transformer_encoder.1} parent=11 // pred_check
          %p368 = pneg %p96
        $region14: #{transformer_encoder.1} parent=11 // pred_check_branch
          %370 = sbr.rel (%p368) target = $region16
        $region15: #{transformer_encoder.1} parent=11 // pred_region
          _
        $region16: #{transformer_encoder.1} parent=11 // pred_fallthru
          _
        // Predicated region
        $region17: #{transformer_encoder.1} parent=11 // pred_check
          %p371 = pneg %p117
        $region18: #{transformer_encoder.1} parent=11 // pred_check_branch
          %373 = sbr.rel (%p371) target = $region20
        $region19: #{transformer_encoder.1} parent=11 // pred_region
          _
        $region20: #{transformer_encoder.1} parent=11 // pred_fallthru
          _
        // Predicated region
        $region21: #{transformer_encoder.1} parent=11 // pred_check
          %p374 = pneg %p138
        $region22: #{transformer_encoder.1} parent=11 // pred_check_branch
          %376 = sbr.rel (%p374) target = $region24
        $region23: #{transformer_encoder.1} parent=11 // pred_region
          _
        $region24: #{transformer_encoder.1} parent=11 // pred_fallthru
          _
        // Predicated region
        $region25: #{transformer_encoder.1} parent=11 // pred_check
          %p377 = pneg %p159
        $region26: #{transformer_encoder.1} parent=11 // pred_check_branch
          %379 = sbr.rel (%p377) target = $region28
        $region27: #{transformer_encoder.1} parent=11 // pred_region
          %381 = vsyncadd [#allocation3], 0
          %s382 = sshll.u32 %s5, 4
          %s383 = int_to_ptr.hbm [resolvable:$true] %s382
          %s384 = sshll.u32 [#allocation2], 4
          %s385 = int_to_ptr.vmem [resolvable:$true] %s384
          %390 = dma.hbm_to_vmem [thread:$0]  %s383, 32, %s385, [#allocation3], 16, 16, 1
        $region28: #{transformer_encoder.1} parent=11 // pred_fallthru
          _
        // Predicated region
        $region29: #{transformer_encoder.1} parent=11 // pred_check
          %p391 = pneg %p180
        $region30: #{transformer_encoder.1} parent=11 // pred_check_branch
          %393 = sbr.rel (%p391) target = $region32
        $region31: #{transformer_encoder.1} parent=11 // pred_region
          _
        $region32: #{transformer_encoder.1} parent=11 // pred_fallthru
          _
        // Predicated region
        $region33: #{transformer_encoder.1} parent=11 // pred_check
          %p394 = pneg %p201
        $region34: #{transformer_encoder.1} parent=11 // pred_check_branch
          %396 = sbr.rel (%p394) target = $region36
        $region35: #{transformer_encoder.1} parent=11 // pred_region
          %398 = vsyncadd [#allocation5], 0
          %s399 = sshll.u32 %s7, 4
          %s400 = int_to_ptr.hbm [resolvable:$true] %s399
          %s401 = sshll.u32 [#allocation4], 4
          %s402 = int_to_ptr.vmem [resolvable:$true] %s401
          %407 = dma.hbm_to_vmem [thread:$0]  %s400, 32, %s402, [#allocation5], 16, 16, 1
        $region36: #{transformer_encoder.1} parent=11 // pred_fallthru
          _
        // Predicated region
        $region37: #{transformer_encoder.1} parent=11 // pred_check
          %p408 = pneg %p222
        $region38: #{transformer_encoder.1} parent=11 // pred_check_branch
          %410 = sbr.rel (%p408) target = $region40
        $region39: #{transformer_encoder.1} parent=11 // pred_region
          _
        $region40: #{transformer_encoder.1} parent=11 // pred_fallthru
          _
        // Predicated region
        $region41: #{transformer_encoder.1} parent=11 // pred_check
          %p411 = pneg %p243
        $region42: #{transformer_encoder.1} parent=11 // pred_check_branch
          %413 = sbr.rel (%p411) target = $region44
        $region43: #{transformer_encoder.1} parent=11 // pred_region
          %415 = vsyncadd [#allocation5], 0
          %s416 = sshll.u32 %s9, 4
          %s417 = int_to_ptr.hbm [resolvable:$true] %s416
          %s418 = sshll.u32 [#allocation6], 4
          %s419 = int_to_ptr.vmem [resolvable:$true] %s418
          %424 = dma.hbm_to_vmem [thread:$0]  %s417, 1024, %s419, [#allocation5], 128, 128, 8
        $region44: #{transformer_encoder.1} parent=11 // pred_fallthru
          _
        // Predicated region
        $region45: #{transformer_encoder.1} parent=11 // pred_check
          %p425 = pneg %p264
        $region46: #{transformer_encoder.1} parent=11 // pred_check_branch
          %427 = sbr.rel (%p425) target = $region48
        $region47: #{transformer_encoder.1} parent=11 // pred_region
          %429 = vsyncadd [#allocation8], 0
          %s430 = sshll.u32 %s10, 4
          %s431 = int_to_ptr.hbm [resolvable:$true] %s430
          %s432 = sshll.u32 [#allocation7], 4
          %s433 = int_to_ptr.vmem [resolvable:$true] %s432
          %438 = dma.hbm_to_vmem [thread:$0]  %s431, 32, %s433, [#allocation8], 16, 16, 1
        $region48: #{transformer_encoder.1} parent=11 // pred_fallthru
          _
        // Predicated region
        $region49: #{transformer_encoder.1} parent=11 // pred_check
          %p439 = pneg %p285
        $region50: #{transformer_encoder.1} parent=11 // pred_check_branch
          %441 = sbr.rel (%p439) target = $region52
        $region51: #{transformer_encoder.1} parent=11 // pred_region
          _
        $region52: #{transformer_encoder.1} parent=11 // pred_fallthru
          _
        // Predicated region
        $region53: #{transformer_encoder.1} parent=11 // pred_check
          %p442 = pneg %p306
        $region54: #{transformer_encoder.1} parent=11 // pred_check_branch
          %444 = sbr.rel (%p442) target = $region56
        $region55: #{transformer_encoder.1} parent=11 // pred_region
          %446 = vsyncadd [#allocation8], 0
          %s447 = sshll.u32 %s12, 4
          %s448 = int_to_ptr.hbm [resolvable:$true] %s447
          %s449 = sshll.u32 [#allocation9], 4
          %s450 = int_to_ptr.vmem [resolvable:$true] %s449
          %455 = dma.hbm_to_vmem [thread:$0]  %s448, 32, %s450, [#allocation8], 16, 16, 1
        $region56: #{transformer_encoder.1} parent=11 // pred_fallthru
          _
        // Predicated region
        $region57: #{transformer_encoder.1} parent=11 // pred_check
          %p456 = pneg %p327
        $region58: #{transformer_encoder.1} parent=11 // pred_check_branch
          %458 = sbr.rel (%p456) target = $region60
        $region59: #{transformer_encoder.1} parent=11 // pred_region
          _
        $region60: #{transformer_encoder.1} parent=11 // pred_fallthru
          _
      $region12: #{transformer_encoder.1} parent=5 // pred_fallthru
        _
      %p459 = scmp.lt.s32.totalorder %s23, 2
      // Predicated region
      $region61: #{transformer_encoder.1} parent=5 // pred_check
        %p460 = pneg %p459
      $region62: #{transformer_encoder.1} parent=5 // pred_check_branch
        %462 = sbr.rel (%p460) target = $region64
      $region63: #{transformer_encoder.1} parent=5 // pred_region
        // Predicated region
        $region65: #{transformer_encoder.1} parent=63 // pred_check
          %p463 = pneg %p43
        $region66: #{transformer_encoder.1} parent=63 // pred_check_branch
          %465 = sbr.rel (%p463) target = $region68
        $region67: #{transformer_encoder.1} parent=63 // pred_region
          %p466 = scmp.lt.s32.totalorder %s23, 1
          %s467 = scalar_select %p466, %s23, 1
          %s468 = smul.addr %s467, 8
          %s469 = scalar_lea.vmem %s0, %s468
        $region68: #{transformer_encoder.1} parent=63 // pred_fallthru
          _
        // Predicated region
        $region69: #{transformer_encoder.1} parent=63 // pred_check
          %p470 = pneg %p69
        $region70: #{transformer_encoder.1} parent=63 // pred_check_branch
          %472 = sbr.rel (%p470) target = $region72
        $region71: #{transformer_encoder.1} parent=63 // pred_region
          %p473 = scmp.lt.s32.totalorder %s23, 1
          %s474 = scalar_select %p473, %s23, 1
          %s475 = smul.addr %s474, 8
          %s476 = scalar_lea.vmem %s1, %s475
        $region72: #{transformer_encoder.1} parent=63 // pred_fallthru
          _
      $region64: #{transformer_encoder.1} parent=5 // pred_fallthru
        _
      %p477 = scmp.le.s32.totalorder 1, %s23
      %p478 = scmp.lt.s32.totalorder %s23, 3
      %p479 = pnand %p477, %p478
      %p480 = pneg %p479
      // Predicated region
      $region73: #{transformer_encoder.1} parent=5 // pred_check
        _
      $region74: #{transformer_encoder.1} parent=5 // pred_check_branch
        %482 = sbr.rel (%p479) target = $region76
      $region75: #{transformer_encoder.1} parent=5 // pred_region
        %s483 = ssub.s32 %s23, 1
        // Predicated region
        $region77: #{transformer_encoder.1} parent=75 // pred_check
          %p484 = pneg %p159
        $region78: #{transformer_encoder.1} parent=75 // pred_check_branch
          %486 = sbr.rel (%p484) target = $region80
        $region79: #{transformer_encoder.1} parent=75 // pred_region
          %488 = dma.done [#allocation3], 32
        $region80: #{transformer_encoder.1} parent=75 // pred_fallthru
          _
        // Predicated region
        $region81: #{transformer_encoder.1} parent=75 // pred_check
          %p489 = pneg %p201
        $region82: #{transformer_encoder.1} parent=75 // pred_check_branch
          %491 = sbr.rel (%p489) target = $region84
        $region83: #{transformer_encoder.1} parent=75 // pred_region
          %493 = dma.done [#allocation5], 32
        $region84: #{transformer_encoder.1} parent=75 // pred_fallthru
          _
        // Predicated region
        $region85: #{transformer_encoder.1} parent=75 // pred_check
          %p494 = pneg %p243
        $region86: #{transformer_encoder.1} parent=75 // pred_check_branch
          %496 = sbr.rel (%p494) target = $region88
        $region87: #{transformer_encoder.1} parent=75 // pred_region
          %498 = dma.done [#allocation5], 1024
        $region88: #{transformer_encoder.1} parent=75 // pred_fallthru
          _
        // Predicated region
        $region89: #{transformer_encoder.1} parent=75 // pred_check
          %p499 = pneg %p264
        $region90: #{transformer_encoder.1} parent=75 // pred_check_branch
          %501 = sbr.rel (%p499) target = $region92
        $region91: #{transformer_encoder.1} parent=75 // pred_region
          %503 = dma.done [#allocation8], 32
        $region92: #{transformer_encoder.1} parent=75 // pred_fallthru
          _
        // Predicated region
        $region93: #{transformer_encoder.1} parent=75 // pred_check
          %p504 = pneg %p306
        $region94: #{transformer_encoder.1} parent=75 // pred_check_branch
          %506 = sbr.rel (%p504) target = $region96
        $region95: #{transformer_encoder.1} parent=75 // pred_region
          %508 = dma.done [#allocation8], 32
        $region96: #{transformer_encoder.1} parent=75 // pred_fallthru
          _
        %p509 = scmp.lt.s32.totalorder %s28, 1
        %s510 = scalar_select %p509, %s28, 1
        %s511 = smul.addr %s510, 8
        %s512 = scalar_lea.vmem %s0, %s511
        %p513 = pneg %p49
        %p514 = pneg %p46
        %p515 = scmp.lt.s32.totalorder %s28, 1
        %s516 = scalar_select %p515, %s28, 1
        %s517 = smul.addr %s516, 8
        %s518 = scalar_lea.vmem %s1, %s517
        %p519 = pneg %p75
        %p520 = pneg %p72
        %p521 = pneg %p96
        %p522 = pneg %p93
        %p523 = pneg %p117
        %p524 = pneg %p114
        %p525 = pneg %p138
        %p526 = pneg %p135
        %p527 = pneg %p159
        %p528 = pneg %p156
        %p529 = pneg %p180
        %p530 = pneg %p177
        %p531 = pneg %p201
        %p532 = pneg %p198
        %p533 = pneg %p222
        %p534 = pneg %p219
        %p535 = pneg %p243
        %p536 = pneg %p240
        %p537 = pneg %p264
        %p538 = pneg %p261
        %p539 = pneg %p285
        %p540 = pneg %p282
        %p541 = pneg %p306
        %p542 = pneg %p303
        %p543 = pneg %p327
        %p544 = pneg %p324
        %p545 = pneg %p353
        %p546 = pneg %p350
        %p547 = scmp.lt.s32.totalorder %s28, 1
        %s548 = scalar_select %p547, %s28, 1
        %s549 = smul.addr %s548, 8
        %s550 = scalar_lea.vmem %s14, %s549
        %p551 = scmp.lt.s32.totalorder %s28, 1
        %s552 = scalar_select %p551, %s28, 1
        %s553 = smul.addr %s552, 8
        %s554 = scalar_lea.vmem %s0, %s553
        %p555 = scmp.lt.s32.totalorder %s28, 1
        %s556 = scalar_select %p555, %s28, 1
        %s557 = smul.addr %s556, 8
        %s558 = scalar_lea.vmem %s1, %s557
        %p559 = scmp.lt.s32.totalorder %s28, 1
        %s560 = scalar_select %p559, %s28, 1
        %s561 = smul.addr %s560, 8
        %s562 = scalar_lea.vmem %s14, %s561
        %v563 = vld [vmem:[%s554] sm:$0xff]
        %v564 = vld [vmem:[%s558] sm:$0xff]
        %v565 = vadd.f32 %v563, %v564
        %v566 = vld [vmem:[%s2] sm:$0xff]
        %v567 = vld [vmem:[%s2 + $0x8] sm:$0xff]
        %v568 = vld [vmem:[%s2 + $0x10] sm:$0xff]
        %v569 = vld [vmem:[%s2 + $0x18] sm:$0xff]
        %v570 = vld [vmem:[%s3] sm:$0x1]
        %v572 = vperm.slane %v570, 0
        %vm574 = vcmask 261120
        %v576 = vsel %vm574, %v565, 0
        %578 = vmatpush.msra.mxu0 0.0
        %579 = vmatpush.msra.mxu0 0.0
        %580 = vmatpush.msra.mxu0 0.0
        %581 = vmatpush.msra.mxu0 0.0
        %582 = vmatpush.msra.mxu0 0.0
        %583 = vmatpush.msra.mxu0 0.0
        %584 = vmatpush.msra.mxu0 0.0
        %585 = vmatpush.msra.mxu0 0.0
        %586 = vmatpush.msra.mxu0 0.0
        %587 = vmatpush.msra.mxu0 0.0
        %588 = vmatpush.msra.mxu0 0.0
        %589 = vmatpush.msra.mxu0 0.0
        %590 = vmatpush.msra.mxu0 %v569
        %591 = vmatpush.msra.mxu0 %v568
        %592 = vmatpush.msra.mxu0 %v567
        %593 = vmatpush.msra.mxu0 %v566
        %594 = vmatmul.f32.gmra.mxu0 %v576
        %v595 = vpop.f32.mrf.mxu0
        %v596 = vadd.f32 %v572, %v595
        %597 = vdwg.mxu0
        %v598 = vld [vmem:[%s4] sm:$0xff]
        %v599 = vld [vmem:[%s4 + $0x8] sm:$0xff]
        %v600 = vld [vmem:[%s4 + $0x10] sm:$0xff]
        %v601 = vld [vmem:[%s4 + $0x18] sm:$0xff]
        %v602 = vld [vmem:[#allocation2] sm:$0x1]
        %v604 = vperm.slane %v602, 0
        %v607 = vsel %vm574, %v563, 0
        %609 = vmatpush.msra.mxu0 0.0
        %610 = vmatpush.msra.mxu0 0.0
        %611 = vmatpush.msra.mxu0 0.0
        %612 = vmatpush.msra.mxu0 0.0
        %613 = vmatpush.msra.mxu0 0.0
        %614 = vmatpush.msra.mxu0 0.0
        %615 = vmatpush.msra.mxu0 0.0
        %616 = vmatpush.msra.mxu0 0.0
        %617 = vmatpush.msra.mxu0 0.0
        %618 = vmatpush.msra.mxu0 0.0
        %619 = vmatpush.msra.mxu0 0.0
        %620 = vmatpush.msra.mxu0 0.0
        %621 = vmatpush.msra.mxu0 %v601
        %622 = vmatpush.msra.mxu0 %v600
        %623 = vmatpush.msra.mxu0 %v599
        %624 = vmatpush.msra.mxu0 %v598
        %625 = vmatmul.f32.gmra.mxu0 %v607
        %v626 = vpop.f32.mrf.mxu0
        %v627 = vadd.f32 %v604, %v626
        %628 = vdwg.mxu0
        %630 = vrot.lane.b32.xlu0 %v596, 120
        %v631 = vpop.permute.xlu0 %630
        %632 = vrot.lane.b32.xlu0 %v596, 112
        %v633 = vpop.permute.xlu0 %632
        %634 = vrot.lane.b32.xlu0 %v596, 104
        %v635 = vpop.permute.xlu0 %634
        %637 = vrot.lane.b32.xlu0 %v627, 120
        %v638 = vpop.permute.xlu0 %637
        %640 = vrot.lane.b32.xlu0 %v627, 112
        %v641 = vpop.permute.xlu0 %640
        %643 = vrot.lane.b32.xlu0 %v627, 104
        %v644 = vpop.permute.xlu0 %643
        %646 = vrot.lane.b32.xlu0 %v596, 96
        %v647 = vpop.permute.xlu0 %646
        %vm648 = vcmask 64512
        %v649 = vsel %vm648, %v596, 0
        %v651 = vsel %vm648, %v647, 0
        %653 = vmatpush.xpose.msra.mxu0 0.0
        %654 = vmatpush.xpose.msra.mxu0 0.0
        %655 = vmatpush.xpose.msra.mxu0 0.0
        %656 = vmatpush.xpose.msra.mxu0 0.0
        %657 = vmatpush.xpose.msra.mxu0 0.0
        %658 = vmatpush.xpose.msra.mxu0 0.0
        %659 = vmatpush.xpose.msra.mxu0 0.0
        %660 = vmatpush.xpose.msra.mxu0 0.0
        %661 = vmatpush.xpose.msra.mxu0 0.0
        %662 = vmatpush.xpose.msra.mxu0 0.0
        %663 = vmatpush.xpose.msra.mxu0 0.0
        %664 = vmatpush.xpose.msra.mxu0 0.0
        %665 = vmatpush.xpose.msra.mxu0 0.0
        %666 = vmatpush.xpose.msra.mxu0 0.0
        %667 = vmatpush.xpose.msra.mxu0 0.0
        %668 = vmatpush.xpose.msra.mxu0 %v651
        %669 = vmatmul.f32.gmra.mxu0 %v649
        %v670 = vpop.f32.mrf.mxu0
        %v671 = vadd.f32 0.0, %v670
        %672 = vdwg.mxu0
        %673 = vrot.lane.b32.xlu0 %v631, 96
        %v674 = vpop.permute.xlu0 %673
        %v675 = vsel %vm648, %v631, 0
        %v677 = vsel %vm648, %v674, 0
        %679 = vmatpush.xpose.msra.mxu0 0.0
        %680 = vmatpush.xpose.msra.mxu0 0.0
        %681 = vmatpush.xpose.msra.mxu0 0.0
        %682 = vmatpush.xpose.msra.mxu0 0.0
        %683 = vmatpush.xpose.msra.mxu0 0.0
        %684 = vmatpush.xpose.msra.mxu0 0.0
        %685 = vmatpush.xpose.msra.mxu0 0.0
        %686 = vmatpush.xpose.msra.mxu0 0.0
        %687 = vmatpush.xpose.msra.mxu0 0.0
        %688 = vmatpush.xpose.msra.mxu0 0.0
        %689 = vmatpush.xpose.msra.mxu0 0.0
        %690 = vmatpush.xpose.msra.mxu0 0.0
        %691 = vmatpush.xpose.msra.mxu0 0.0
        %692 = vmatpush.xpose.msra.mxu0 0.0
        %693 = vmatpush.xpose.msra.mxu0 0.0
        %694 = vmatpush.xpose.msra.mxu0 %v677
        %695 = vmatmul.f32.gmra.mxu0 %v675
        %v696 = vpop.f32.mrf.mxu0
        %v697 = vadd.f32 0.0, %v696
        %698 = vdwg.mxu0
        %699 = vrot.lane.b32.xlu0 %v633, 96
        %v700 = vpop.permute.xlu0 %699
        %v701 = vsel %vm648, %v633, 0
        %v703 = vsel %vm648, %v700, 0
        %705 = vmatpush.xpose.msra.mxu0 0.0
        %706 = vmatpush.xpose.msra.mxu0 0.0
        %707 = vmatpush.xpose.msra.mxu0 0.0
        %708 = vmatpush.xpose.msra.mxu0 0.0
        %709 = vmatpush.xpose.msra.mxu0 0.0
        %710 = vmatpush.xpose.msra.mxu0 0.0
        %711 = vmatpush.xpose.msra.mxu0 0.0
        %712 = vmatpush.xpose.msra.mxu0 0.0
        %713 = vmatpush.xpose.msra.mxu0 0.0
        %714 = vmatpush.xpose.msra.mxu0 0.0
        %715 = vmatpush.xpose.msra.mxu0 0.0
        %716 = vmatpush.xpose.msra.mxu0 0.0
        %717 = vmatpush.xpose.msra.mxu0 0.0
        %718 = vmatpush.xpose.msra.mxu0 0.0
        %719 = vmatpush.xpose.msra.mxu0 0.0
        %720 = vmatpush.xpose.msra.mxu0 %v703
        %721 = vmatmul.f32.gmra.mxu0 %v701
        %v722 = vpop.f32.mrf.mxu0
        %v723 = vadd.f32 0.0, %v722
        %724 = vdwg.mxu0
        %725 = vrot.lane.b32.xlu0 %v635, 96
        %v726 = vpop.permute.xlu0 %725
        %v727 = vsel %vm648, %v635, 0
        %v729 = vsel %vm648, %v726, 0
        %731 = vmatpush.xpose.msra.mxu0 0.0
        %732 = vmatpush.xpose.msra.mxu0 0.0
        %733 = vmatpush.xpose.msra.mxu0 0.0
        %734 = vmatpush.xpose.msra.mxu0 0.0
        %735 = vmatpush.xpose.msra.mxu0 0.0
        %736 = vmatpush.xpose.msra.mxu0 0.0
        %737 = vmatpush.xpose.msra.mxu0 0.0
        %738 = vmatpush.xpose.msra.mxu0 0.0
        %739 = vmatpush.xpose.msra.mxu0 0.0
        %740 = vmatpush.xpose.msra.mxu0 0.0
        %741 = vmatpush.xpose.msra.mxu0 0.0
        %742 = vmatpush.xpose.msra.mxu0 0.0
        %743 = vmatpush.xpose.msra.mxu0 0.0
        %744 = vmatpush.xpose.msra.mxu0 0.0
        %745 = vmatpush.xpose.msra.mxu0 0.0
        %746 = vmatpush.xpose.msra.mxu0 %v729
        %747 = vmatmul.f32.gmra.mxu0 %v727
        %v748 = vpop.f32.mrf.mxu0
        %v749 = vadd.f32 0.0, %v748
        %750 = vdwg.mxu0
        %v751 = vsel %vm648, %v671, -inf
        %752 = vmax.xlane.f32.xlu0 %v751
        %v753 = vpop.xlane.xlu0 %752
        %v754 = vsel %vm648, %v697, -inf
        %755 = vmax.xlane.f32.xlu0 %v754
        %v756 = vpop.xlane.xlu0 %755
        %v757 = vsel %vm648, %v723, -inf
        %758 = vmax.xlane.f32.xlu0 %v757
        %v759 = vpop.xlane.xlu0 %758
        %v760 = vsel %vm648, %v749, -inf
        %761 = vmax.xlane.f32.xlu0 %v760
        %v762 = vpop.xlane.xlu0 %761
        %v763 = vsub.f32 %v671, %v753
        %v764 = vsub.f32 %v697, %v756
        %v765 = vsub.f32 %v723, %v759
        %v766 = vsub.f32 %v749, %v762
        %v767 = vmul.f32 %v763, 1.442695
        %v768 = vpow.pop %v767
        %v769 = vmul.f32 %v764, 1.442695
        %v770 = vpow.pop %v769
        %v771 = vmul.f32 %v765, 1.442695
        %v772 = vpow.pop %v771
        %v773 = vmul.f32 %v766, 1.442695
        %v774 = vpow.pop %v773
        %v775 = vsel %vm648, %v768, 0.0
        %776 = vadd.xlane.f32.xlu0 %v775
        %v777 = vpop.xlane.xlu0 %776
        %v778 = vsel %vm648, %v770, 0.0
        %779 = vadd.xlane.f32.xlu0 %v778
        %v780 = vpop.xlane.xlu0 %779
        %v781 = vsel %vm648, %v772, 0.0
        %782 = vadd.xlane.f32.xlu0 %v781
        %v783 = vpop.xlane.xlu0 %782
        %v784 = vsel %vm648, %v774, 0.0
        %785 = vadd.xlane.f32.xlu0 %v784
        %v786 = vpop.xlane.xlu0 %785
        %v787 = vrcp.pop %v777
        %v788 = vmul.f32 %v777, %v787
        %v789 = vsub.f32 1.0, %v788
        %v790 = vmul.f32 %v787, %v789
        %v791 = vadd.f32 %v787, %v790
        %vm792 = vweird.f32 %v777
        %vm793 = vweird.f32 %v787
        %vm794 = vmor %vm792, %vm793
        %v795 = vsel %vm794, %v787, %v791
        %v796 = vand.u32 2147483647, %v777
        %vm797 = vcmp.eq.f32.partialorder %v796, 8.507059e+37
        %v798 = vand.u32 %v777, 2147483648
        %v799 = vor.u32 1.1754944e-38, %v798
        %v800 = vsel %vm797, %v799, %v795
        %v801 = vmul.f32 %v768, %v800
        %v802 = vrcp.pop %v780
        %v803 = vmul.f32 %v780, %v802
        %v804 = vsub.f32 1.0, %v803
        %v805 = vmul.f32 %v802, %v804
        %v806 = vadd.f32 %v802, %v805
        %vm807 = vweird.f32 %v780
        %vm808 = vweird.f32 %v802
        %vm809 = vmor %vm807, %vm808
        %v810 = vsel %vm809, %v802, %v806
        %v811 = vand.u32 2147483647, %v780
        %vm812 = vcmp.eq.f32.partialorder %v811, 8.507059e+37
        %v813 = vand.u32 %v780, 2147483648
        %v814 = vor.u32 1.1754944e-38, %v813
        %v815 = vsel %vm812, %v814, %v810
        %v816 = vmul.f32 %v770, %v815
        %v817 = vrcp.pop %v783
        %v818 = vmul.f32 %v783, %v817
        %v819 = vsub.f32 1.0, %v818
        %v820 = vmul.f32 %v817, %v819
        %v821 = vadd.f32 %v817, %v820
        %vm822 = vweird.f32 %v783
        %vm823 = vweird.f32 %v817
        %vm824 = vmor %vm822, %vm823
        %v825 = vsel %vm824, %v817, %v821
        %v826 = vand.u32 2147483647, %v783
        %vm827 = vcmp.eq.f32.partialorder %v826, 8.507059e+37
        %v828 = vand.u32 %v783, 2147483648
        %v829 = vor.u32 1.1754944e-38, %v828
        %v830 = vsel %vm827, %v829, %v825
        %v831 = vmul.f32 %v772, %v830
        %v832 = vrcp.pop %v786
        %v833 = vmul.f32 %v786, %v832
        %v834 = vsub.f32 1.0, %v833
        %v835 = vmul.f32 %v832, %v834
        %v836 = vadd.f32 %v832, %v835
        %vm837 = vweird.f32 %v786
        %vm838 = vweird.f32 %v832
        %vm839 = vmor %vm837, %vm838
        %v840 = vsel %vm839, %v832, %v836
        %v841 = vand.u32 2147483647, %v786
        %vm842 = vcmp.eq.f32.partialorder %v841, 8.507059e+37
        %v843 = vand.u32 %v786, 2147483648
        %v844 = vor.u32 1.1754944e-38, %v843
        %v845 = vsel %vm842, %v844, %v840
        %v846 = vmul.f32 %v774, %v845
        %v848 = vsel %vm648, %v801, 0
        %850 = vmatpush.msra.mxu0 0.0
        %851 = vmatpush.msra.mxu0 0.0
        %852 = vmatpush.msra.mxu0 0.0
        %853 = vmatpush.msra.mxu0 0.0
        %854 = vmatpush.msra.mxu0 0.0
        %855 = vmatpush.msra.mxu0 0.0
        %856 = vmatpush.msra.mxu0 0.0
        %857 = vmatpush.msra.mxu0 0.0
        %858 = vmatpush.msra.mxu0 0.0
        %859 = vmatpush.msra.mxu0 0.0
        %860 = vmatpush.msra.mxu0 0.0
        %861 = vmatpush.msra.mxu0 0.0
        %862 = vmatpush.msra.mxu0 0.0
        %863 = vmatpush.msra.mxu0 0.0
        %864 = vmatpush.msra.mxu0 0.0
        %865 = vmatpush.msra.mxu0 %v627
        %866 = vmatmul.f32.gmra.mxu0 %v848
        %v867 = vpop.f32.mrf.mxu0
        %v868 = vadd.f32 0.0, %v867
        %869 = vdwg.mxu0
        %v871 = vsel %vm648, %v816, 0
        %873 = vmatpush.msra.mxu0 0.0
        %874 = vmatpush.msra.mxu0 0.0
        %875 = vmatpush.msra.mxu0 0.0
        %876 = vmatpush.msra.mxu0 0.0
        %877 = vmatpush.msra.mxu0 0.0
        %878 = vmatpush.msra.mxu0 0.0
        %879 = vmatpush.msra.mxu0 0.0
        %880 = vmatpush.msra.mxu0 0.0
        %881 = vmatpush.msra.mxu0 0.0
        %882 = vmatpush.msra.mxu0 0.0
        %883 = vmatpush.msra.mxu0 0.0
        %884 = vmatpush.msra.mxu0 0.0
        %885 = vmatpush.msra.mxu0 0.0
        %886 = vmatpush.msra.mxu0 0.0
        %887 = vmatpush.msra.mxu0 0.0
        %888 = vmatpush.msra.mxu0 %v638
        %889 = vmatmul.f32.gmra.mxu0 %v871
        %v890 = vpop.f32.mrf.mxu0
        %v891 = vadd.f32 0.0, %v890
        %892 = vdwg.mxu0
        %v894 = vsel %vm648, %v831, 0
        %896 = vmatpush.msra.mxu0 0.0
        %897 = vmatpush.msra.mxu0 0.0
        %898 = vmatpush.msra.mxu0 0.0
        %899 = vmatpush.msra.mxu0 0.0
        %900 = vmatpush.msra.mxu0 0.0
        %901 = vmatpush.msra.mxu0 0.0
        %902 = vmatpush.msra.mxu0 0.0
        %903 = vmatpush.msra.mxu0 0.0
        %904 = vmatpush.msra.mxu0 0.0
        %905 = vmatpush.msra.mxu0 0.0
        %906 = vmatpush.msra.mxu0 0.0
        %907 = vmatpush.msra.mxu0 0.0
        %908 = vmatpush.msra.mxu0 0.0
        %909 = vmatpush.msra.mxu0 0.0
        %910 = vmatpush.msra.mxu0 0.0
        %911 = vmatpush.msra.mxu0 %v641
        %912 = vmatmul.f32.gmra.mxu0 %v894
        %v913 = vpop.f32.mrf.mxu0
        %v914 = vadd.f32 0.0, %v913
        %915 = vdwg.mxu0
        %v917 = vsel %vm648, %v846, 0
        %919 = vmatpush.msra.mxu0 0.0
        %920 = vmatpush.msra.mxu0 0.0
        %921 = vmatpush.msra.mxu0 0.0
        %922 = vmatpush.msra.mxu0 0.0
        %923 = vmatpush.msra.mxu0 0.0
        %924 = vmatpush.msra.mxu0 0.0
        %925 = vmatpush.msra.mxu0 0.0
        %926 = vmatpush.msra.mxu0 0.0
        %927 = vmatpush.msra.mxu0 0.0
        %928 = vmatpush.msra.mxu0 0.0
        %929 = vmatpush.msra.mxu0 0.0
        %930 = vmatpush.msra.mxu0 0.0
        %931 = vmatpush.msra.mxu0 0.0
        %932 = vmatpush.msra.mxu0 0.0
        %933 = vmatpush.msra.mxu0 0.0
        %934 = vmatpush.msra.mxu0 %v644
        %935 = vmatmul.f32.gmra.mxu0 %v917
        %v936 = vpop.f32.mrf.mxu0
        %v937 = vadd.f32 0.0, %v936
        %938 = vdwg.mxu0
        %940 = vrot.lane.b32.xlu0 %v891, 8
        %v941 = vpop.permute.xlu0 %940
        %944 = vrot.lane.b32.xlu0 %v914, 16
        %v945 = vpop.permute.xlu0 %944
        %948 = vrot.lane.b32.xlu0 %v937, 24
        %v949 = vpop.permute.xlu0 %948
        %v951 = vsel %vm648, %v868, %v941
        %vm952 = vcmask 130048
        %v953 = vsel %vm952, %v951, %v945
        %vm954 = vcmask 195584
        %v955 = vsel %vm954, %v953, %v949
        %v956 = vld [vmem:[%s6] sm:$0xff]
        %v957 = vld [vmem:[%s6 + $0x8] sm:$0xff]
        %v958 = vld [vmem:[%s6 + $0x10] sm:$0xff]
        %v959 = vld [vmem:[%s6 + $0x18] sm:$0xff]
        %v960 = vld [vmem:[#allocation4] sm:$0x1]
        %v962 = vperm.slane %v960, 0
        %v965 = vsel %vm574, %v955, 0
        %967 = vmatpush.msra.mxu0 0.0
        %968 = vmatpush.msra.mxu0 0.0
        %969 = vmatpush.msra.mxu0 0.0
        %970 = vmatpush.msra.mxu0 0.0
        %971 = vmatpush.msra.mxu0 0.0
        %972 = vmatpush.msra.mxu0 0.0
        %973 = vmatpush.msra.mxu0 0.0
        %974 = vmatpush.msra.mxu0 0.0
        %975 = vmatpush.msra.mxu0 0.0
        %976 = vmatpush.msra.mxu0 0.0
        %977 = vmatpush.msra.mxu0 0.0
        %978 = vmatpush.msra.mxu0 0.0
        %979 = vmatpush.msra.mxu0 %v959
        %980 = vmatpush.msra.mxu0 %v958
        %981 = vmatpush.msra.mxu0 %v957
        %982 = vmatpush.msra.mxu0 %v956
        %983 = vmatmul.f32.gmra.mxu0 %v965
        %v984 = vpop.f32.mrf.mxu0
        %v985 = vadd.f32 %v962, %v984
        %986 = vdwg.mxu0
        %v987 = vld [vmem:[%s8] sm:$0x3]
        %v988 = vadd.f32 %v563, %v985
        %v989 = vsel %vm574, %v988, 0.0
        %990 = vadd.xlane.f32.xlu0 %v989
        %v991 = vpop.xlane.xlu0 %990
        %v992 = vrcp.pop 32.0
        %v993 = vmul.f32 32.0, %v992
        %v994 = vsub.f32 1.0, %v993
        %v995 = vmul.f32 %v992, %v994
        %v996 = vadd.f32 %v992, %v995
        %vm997 = vweird.f32 %v992
        %v998 = vsel %vm997, %v992, %v996
        %v999 = vmul.f32 %v991, %v998
        %v1000 = vsub.f32 %v988, %v999
        %v1001 = vmul.f32 %v1000, %v1000
        %v1002 = vsel %vm574, %v1001, 0.0
        %1003 = vadd.xlane.f32.xlu0 %v1002
        %v1004 = vpop.xlane.xlu0 %1003
        %v1005 = vmul.f32 %v1004, %v998
        %v1006 = vadd.f32 %v1005, 1e-05
        %v1007 = vrsqrt.pop %v1006
        %v1008 = vmul.f32 %v1007, %v1006
        %v1009 = vmul.f32 %v1008, %v1007
        %v1010 = vmul.f32 0.5, %v1009
        %v1011 = vsub.f32 1.5, %v1010
        %v1012 = vmul.f32 %v1007, %v1011
        %vm1013 = vweird.f32 %v1006
        %vm1014 = vweird.f32 %v1007
        %vm1015 = vmor %vm1013, %vm1014
        %v1016 = vsel %vm1015, %v1007, %v1012
        %v1017 = vmul.f32 %v1000, %v1016
        %v1018 = vperm.slane %v987, 0
        %v1019 = vmul.f32 %v1017, %v1018
        %v1020 = vperm.slane %v987, 1
        %v1021 = vadd.f32 %v1019, %v1020
        %v1022 = vld [vmem:[#allocation6] sm:$0xff]
        %v1023 = vld [vmem:[#allocation6 + $0x8] sm:$0xff]
        %v1024 = vld [vmem:[#allocation6 + $0x10] sm:$0xff]
        %v1025 = vld [vmem:[#allocation6 + $0x18] sm:$0xff]
        %v1026 = vld [vmem:[#allocation7] sm:$0x1]
        %v1028 = vperm.slane %v1026, 0
        %v1031 = vsel %vm574, %v1021, 0
        %1033 = vmatpush.msra.mxu0 0.0
        %1034 = vmatpush.msra.mxu0 0.0
        %1035 = vmatpush.msra.mxu0 0.0
        %1036 = vmatpush.msra.mxu0 0.0
        %1037 = vmatpush.msra.mxu0 0.0
        %1038 = vmatpush.msra.mxu0 0.0
        %1039 = vmatpush.msra.mxu0 0.0
        %1040 = vmatpush.msra.mxu0 0.0
        %1041 = vmatpush.msra.mxu0 0.0
        %1042 = vmatpush.msra.mxu0 0.0
        %1043 = vmatpush.msra.mxu0 0.0
        %1044 = vmatpush.msra.mxu0 0.0
        %1045 = vmatpush.msra.mxu0 %v1025
        %1046 = vmatpush.msra.mxu0 %v1024
        %1047 = vmatpush.msra.mxu0 %v1023
        %1048 = vmatpush.msra.mxu0 %v1022
        %1049 = vmatmul.f32.gmra.mxu0 %v1031
        %v1050 = vpop.f32.mrf.mxu0
        %v1051 = vadd.f32 %v1028, %v1050
        %1052 = vdwg.mxu0
        %v1053 = vmax.f32 %v1051, 0.0
        %v1054 = vld [vmem:[%s11] sm:$0xff]
        %v1055 = vld [vmem:[%s11 + $0x8] sm:$0xff]
        %v1056 = vld [vmem:[%s11 + $0x10] sm:$0xff]
        %v1057 = vld [vmem:[%s11 + $0x18] sm:$0xff]
        %v1058 = vld [vmem:[%s11 + $0x20] sm:$0xff]
        %v1059 = vld [vmem:[%s11 + $0x28] sm:$0xff]
        %v1060 = vld [vmem:[%s11 + $0x30] sm:$0xff]
        %v1061 = vld [vmem:[%s11 + $0x38] sm:$0xff]
        %v1062 = vld [vmem:[#allocation9] sm:$0x1]
        %v1064 = vperm.slane %v1062, 0
        %vm1066 = vcmask 523264
        %v1068 = vsel %vm1066, %v1053, 0
        %1070 = vmatpush.msra.mxu0 0.0
        %1071 = vmatpush.msra.mxu0 0.0
        %1072 = vmatpush.msra.mxu0 0.0
        %1073 = vmatpush.msra.mxu0 0.0
        %1074 = vmatpush.msra.mxu0 0.0
        %1075 = vmatpush.msra.mxu0 0.0
        %1076 = vmatpush.msra.mxu0 0.0
        %1077 = vmatpush.msra.mxu0 0.0
        %1078 = vmatpush.msra.mxu0 %v1061
        %1079 = vmatpush.msra.mxu0 %v1060
        %1080 = vmatpush.msra.mxu0 %v1059
        %1081 = vmatpush.msra.mxu0 %v1058
        %1082 = vmatpush.msra.mxu0 %v1057
        %1083 = vmatpush.msra.mxu0 %v1056
        %1084 = vmatpush.msra.mxu0 %v1055
        %1085 = vmatpush.msra.mxu0 %v1054
        %1086 = vmatmul.f32.gmra.mxu0 %v1068
        %v1087 = vpop.f32.mrf.mxu0
        %v1088 = vadd.f32 %v1064, %v1087
        %1089 = vdwg.mxu0
        %v1090 = vld [vmem:[%s13] sm:$0x3]
        %v1091 = vadd.f32 %v1021, %v1088
        %v1092 = vsel %vm574, %v1091, 0.0
        %1093 = vadd.xlane.f32.xlu0 %v1092
        %v1094 = vpop.xlane.xlu0 %1093
        %v1095 = vmul.f32 %v1094, %v998
        %v1096 = vsub.f32 %v1091, %v1095
        %v1097 = vmul.f32 %v1096, %v1096
        %v1098 = vsel %vm574, %v1097, 0.0
        %1099 = vadd.xlane.f32.xlu0 %v1098
        %v1100 = vpop.xlane.xlu0 %1099
        %v1101 = vmul.f32 %v1100, %v998
        %v1102 = vadd.f32 %v1101, 1e-05
        %v1103 = vrsqrt.pop %v1102
        %v1104 = vmul.f32 %v1103, %v1102
        %v1105 = vmul.f32 %v1104, %v1103
        %v1106 = vmul.f32 0.5, %v1105
        %v1107 = vsub.f32 1.5, %v1106
        %v1108 = vmul.f32 %v1103, %v1107
        %vm1109 = vweird.f32 %v1102
        %vm1110 = vweird.f32 %v1103
        %vm1111 = vmor %vm1109, %vm1110
        %v1112 = vsel %vm1111, %v1103, %v1108
        %v1113 = vmul.f32 %v1096, %v1112
        %v1114 = vperm.slane %v1090, 0
        %v1115 = vmul.f32 %v1113, %v1114
        %v1116 = vperm.slane %v1090, 1
        %v1117 = vadd.f32 %v1115, %v1116
        %v1118 = vadd.f32 %v1117, %v564
        %s1119 = scalar_lea.vmem %s2, 32
        %v1120 = vld [vmem:[%s1119] sm:$0xff]
        %v1121 = vld [vmem:[%s1119 + $0x8] sm:$0xff]
        %v1122 = vld [vmem:[%s1119 + $0x10] sm:$0xff]
        %v1123 = vld [vmem:[%s1119 + $0x18] sm:$0xff]
        %s1124 = scalar_lea.vmem %s3, 1
        %v1125 = vld [vmem:[%s1124] sm:$0x1]
        %v1127 = vperm.slane %v1125, 0
        %v1130 = vsel %vm574, %v1118, 0
        %1132 = vmatpush.msra.mxu0 0.0
        %1133 = vmatpush.msra.mxu0 0.0
        %1134 = vmatpush.msra.mxu0 0.0
        %1135 = vmatpush.msra.mxu0 0.0
        %1136 = vmatpush.msra.mxu0 0.0
        %1137 = vmatpush.msra.mxu0 0.0
        %1138 = vmatpush.msra.mxu0 0.0
        %1139 = vmatpush.msra.mxu0 0.0
        %1140 = vmatpush.msra.mxu0 0.0
        %1141 = vmatpush.msra.mxu0 0.0
        %1142 = vmatpush.msra.mxu0 0.0
        %1143 = vmatpush.msra.mxu0 0.0
        %1144 = vmatpush.msra.mxu0 %v1123
        %1145 = vmatpush.msra.mxu0 %v1122
        %1146 = vmatpush.msra.mxu0 %v1121
        %1147 = vmatpush.msra.mxu0 %v1120
        %1148 = vmatmul.f32.gmra.mxu0 %v1130
        %v1149 = vpop.f32.mrf.mxu0
        %v1150 = vadd.f32 %v1127, %v1149
        %1151 = vdwg.mxu0
        %s1152 = scalar_lea.vmem %s4, 32
        %v1153 = vld [vmem:[%s1152] sm:$0xff]
        %v1154 = vld [vmem:[%s1152 + $0x8] sm:$0xff]
        %v1155 = vld [vmem:[%s1152 + $0x10] sm:$0xff]
        %v1156 = vld [vmem:[%s1152 + $0x18] sm:$0xff]
        %s1157 = scalar_lea.vmem [#allocation2], 1
        %v1158 = vld [vmem:[%s1157] sm:$0x1]
        %v1160 = vperm.slane %v1158, 0
        %v1163 = vsel %vm574, %v1117, 0
        %1165 = vmatpush.msra.mxu0 0.0
        %1166 = vmatpush.msra.mxu0 0.0
        %1167 = vmatpush.msra.mxu0 0.0
        %1168 = vmatpush.msra.mxu0 0.0
        %1169 = vmatpush.msra.mxu0 0.0
        %1170 = vmatpush.msra.mxu0 0.0
        %1171 = vmatpush.msra.mxu0 0.0
        %1172 = vmatpush.msra.mxu0 0.0
        %1173 = vmatpush.msra.mxu0 0.0
        %1174 = vmatpush.msra.mxu0 0.0
        %1175 = vmatpush.msra.mxu0 0.0
        %1176 = vmatpush.msra.mxu0 0.0
        %1177 = vmatpush.msra.mxu0 %v1156
        %1178 = vmatpush.msra.mxu0 %v1155
        %1179 = vmatpush.msra.mxu0 %v1154
        %1180 = vmatpush.msra.mxu0 %v1153
        %1181 = vmatmul.f32.gmra.mxu0 %v1163
        %v1182 = vpop.f32.mrf.mxu0
        %v1183 = vadd.f32 %v1160, %v1182
        %1184 = vdwg.mxu0
        %1186 = vrot.lane.b32.xlu0 %v1150, 120
        %v1187 = vpop.permute.xlu0 %1186
        %1188 = vrot.lane.b32.xlu0 %v1150, 112
        %v1189 = vpop.permute.xlu0 %1188
        %1190 = vrot.lane.b32.xlu0 %v1150, 104
        %v1191 = vpop.permute.xlu0 %1190
        %1193 = vrot.lane.b32.xlu0 %v1183, 120
        %v1194 = vpop.permute.xlu0 %1193
        %1196 = vrot.lane.b32.xlu0 %v1183, 112
        %v1197 = vpop.permute.xlu0 %1196
        %1199 = vrot.lane.b32.xlu0 %v1183, 104
        %v1200 = vpop.permute.xlu0 %1199
        %1202 = vrot.lane.b32.xlu0 %v1150, 96
        %v1203 = vpop.permute.xlu0 %1202
        %v1204 = vsel %vm648, %v1150, 0
        %v1206 = vsel %vm648, %v1203, 0
        %1208 = vmatpush.xpose.msra.mxu0 0.0
        %1209 = vmatpush.xpose.msra.mxu0 0.0
        %1210 = vmatpush.xpose.msra.mxu0 0.0
        %1211 = vmatpush.xpose.msra.mxu0 0.0
        %1212 = vmatpush.xpose.msra.mxu0 0.0
        %1213 = vmatpush.xpose.msra.mxu0 0.0
        %1214 = vmatpush.xpose.msra.mxu0 0.0
        %1215 = vmatpush.xpose.msra.mxu0 0.0
        %1216 = vmatpush.xpose.msra.mxu0 0.0
        %1217 = vmatpush.xpose.msra.mxu0 0.0
        %1218 = vmatpush.xpose.msra.mxu0 0.0
        %1219 = vmatpush.xpose.msra.mxu0 0.0
        %1220 = vmatpush.xpose.msra.mxu0 0.0
        %1221 = vmatpush.xpose.msra.mxu0 0.0
        %1222 = vmatpush.xpose.msra.mxu0 0.0
        %1223 = vmatpush.xpose.msra.mxu0 %v1206
        %1224 = vmatmul.f32.gmra.mxu0 %v1204
        %v1225 = vpop.f32.mrf.mxu0
        %v1226 = vadd.f32 0.0, %v1225
        %1227 = vdwg.mxu0
        %1228 = vrot.lane.b32.xlu0 %v1187, 96
        %v1229 = vpop.permute.xlu0 %1228
        %v1230 = vsel %vm648, %v1187, 0
        %v1232 = vsel %vm648, %v1229, 0
        %1234 = vmatpush.xpose.msra.mxu0 0.0
        %1235 = vmatpush.xpose.msra.mxu0 0.0
        %1236 = vmatpush.xpose.msra.mxu0 0.0
        %1237 = vmatpush.xpose.msra.mxu0 0.0
        %1238 = vmatpush.xpose.msra.mxu0 0.0
        %1239 = vmatpush.xpose.msra.mxu0 0.0
        %1240 = vmatpush.xpose.msra.mxu0 0.0
        %1241 = vmatpush.xpose.msra.mxu0 0.0
        %1242 = vmatpush.xpose.msra.mxu0 0.0
        %1243 = vmatpush.xpose.msra.mxu0 0.0
        %1244 = vmatpush.xpose.msra.mxu0 0.0
        %1245 = vmatpush.xpose.msra.mxu0 0.0
        %1246 = vmatpush.xpose.msra.mxu0 0.0
        %1247 = vmatpush.xpose.msra.mxu0 0.0
        %1248 = vmatpush.xpose.msra.mxu0 0.0
        %1249 = vmatpush.xpose.msra.mxu0 %v1232
        %1250 = vmatmul.f32.gmra.mxu0 %v1230
        %v1251 = vpop.f32.mrf.mxu0
        %v1252 = vadd.f32 0.0, %v1251
        %1253 = vdwg.mxu0
        %1254 = vrot.lane.b32.xlu0 %v1189, 96
        %v1255 = vpop.permute.xlu0 %1254
        %v1256 = vsel %vm648, %v1189, 0
        %v1258 = vsel %vm648, %v1255, 0
        %1260 = vmatpush.xpose.msra.mxu0 0.0
        %1261 = vmatpush.xpose.msra.mxu0 0.0
        %1262 = vmatpush.xpose.msra.mxu0 0.0
        %1263 = vmatpush.xpose.msra.mxu0 0.0
        %1264 = vmatpush.xpose.msra.mxu0 0.0
        %1265 = vmatpush.xpose.msra.mxu0 0.0
        %1266 = vmatpush.xpose.msra.mxu0 0.0
        %1267 = vmatpush.xpose.msra.mxu0 0.0
        %1268 = vmatpush.xpose.msra.mxu0 0.0
        %1269 = vmatpush.xpose.msra.mxu0 0.0
        %1270 = vmatpush.xpose.msra.mxu0 0.0
        %1271 = vmatpush.xpose.msra.mxu0 0.0
        %1272 = vmatpush.xpose.msra.mxu0 0.0
        %1273 = vmatpush.xpose.msra.mxu0 0.0
        %1274 = vmatpush.xpose.msra.mxu0 0.0
        %1275 = vmatpush.xpose.msra.mxu0 %v1258
        %1276 = vmatmul.f32.gmra.mxu0 %v1256
        %v1277 = vpop.f32.mrf.mxu0
        %v1278 = vadd.f32 0.0, %v1277
        %1279 = vdwg.mxu0
        %1280 = vrot.lane.b32.xlu0 %v1191, 96
        %v1281 = vpop.permute.xlu0 %1280
        %v1282 = vsel %vm648, %v1191, 0
        %v1284 = vsel %vm648, %v1281, 0
        %1286 = vmatpush.xpose.msra.mxu0 0.0
        %1287 = vmatpush.xpose.msra.mxu0 0.0
        %1288 = vmatpush.xpose.msra.mxu0 0.0
        %1289 = vmatpush.xpose.msra.mxu0 0.0
        %1290 = vmatpush.xpose.msra.mxu0 0.0
        %1291 = vmatpush.xpose.msra.mxu0 0.0
        %1292 = vmatpush.xpose.msra.mxu0 0.0
        %1293 = vmatpush.xpose.msra.mxu0 0.0
        %1294 = vmatpush.xpose.msra.mxu0 0.0
        %1295 = vmatpush.xpose.msra.mxu0 0.0
        %1296 = vmatpush.xpose.msra.mxu0 0.0
        %1297 = vmatpush.xpose.msra.mxu0 0.0
        %1298 = vmatpush.xpose.msra.mxu0 0.0
        %1299 = vmatpush.xpose.msra.mxu0 0.0
        %1300 = vmatpush.xpose.msra.mxu0 0.0
        %1301 = vmatpush.xpose.msra.mxu0 %v1284
        %1302 = vmatmul.f32.gmra.mxu0 %v1282
        %v1303 = vpop.f32.mrf.mxu0
        %v1304 = vadd.f32 0.0, %v1303
        %1305 = vdwg.mxu0
        %v1306 = vsel %vm648, %v1226, -inf
        %1307 = vmax.xlane.f32.xlu0 %v1306
        %v1308 = vpop.xlane.xlu0 %1307
        %v1309 = vsel %vm648, %v1252, -inf
        %1310 = vmax.xlane.f32.xlu0 %v1309
        %v1311 = vpop.xlane.xlu0 %1310
        %v1312 = vsel %vm648, %v1278, -inf
        %1313 = vmax.xlane.f32.xlu0 %v1312
        %v1314 = vpop.xlane.xlu0 %1313
        %v1315 = vsel %vm648, %v1304, -inf
        %1316 = vmax.xlane.f32.xlu0 %v1315
        %v1317 = vpop.xlane.xlu0 %1316
        %v1318 = vsub.f32 %v1226, %v1308
        %v1319 = vsub.f32 %v1252, %v1311
        %v1320 = vsub.f32 %v1278, %v1314
        %v1321 = vsub.f32 %v1304, %v1317
        %v1322 = vmul.f32 %v1318, 1.442695
        %v1323 = vpow.pop %v1322
        %v1324 = vmul.f32 %v1319, 1.442695
        %v1325 = vpow.pop %v1324
        %v1326 = vmul.f32 %v1320, 1.442695
        %v1327 = vpow.pop %v1326
        %v1328 = vmul.f32 %v1321, 1.442695
        %v1329 = vpow.pop %v1328
        %v1330 = vsel %vm648, %v1323, 0.0
        %1331 = vadd.xlane.f32.xlu0 %v1330
        %v1332 = vpop.xlane.xlu0 %1331
        %v1333 = vsel %vm648, %v1325, 0.0
        %1334 = vadd.xlane.f32.xlu0 %v1333
        %v1335 = vpop.xlane.xlu0 %1334
        %v1336 = vsel %vm648, %v1327, 0.0
        %1337 = vadd.xlane.f32.xlu0 %v1336
        %v1338 = vpop.xlane.xlu0 %1337
        %v1339 = vsel %vm648, %v1329, 0.0
        %1340 = vadd.xlane.f32.xlu0 %v1339
        %v1341 = vpop.xlane.xlu0 %1340
        %v1342 = vrcp.pop %v1332
        %v1343 = vmul.f32 %v1332, %v1342
        %v1344 = vsub.f32 1.0, %v1343
        %v1345 = vmul.f32 %v1342, %v1344
        %v1346 = vadd.f32 %v1342, %v1345
        %vm1347 = vweird.f32 %v1332
        %vm1348 = vweird.f32 %v1342
        %vm1349 = vmor %vm1347, %vm1348
        %v1350 = vsel %vm1349, %v1342, %v1346
        %v1351 = vand.u32 2147483647, %v1332
        %vm1352 = vcmp.eq.f32.partialorder %v1351, 8.507059e+37
        %v1353 = vand.u32 %v1332, 2147483648
        %v1354 = vor.u32 1.1754944e-38, %v1353
        %v1355 = vsel %vm1352, %v1354, %v1350
        %v1356 = vmul.f32 %v1323, %v1355
        %v1357 = vrcp.pop %v1335
        %v1358 = vmul.f32 %v1335, %v1357
        %v1359 = vsub.f32 1.0, %v1358
        %v1360 = vmul.f32 %v1357, %v1359
        %v1361 = vadd.f32 %v1357, %v1360
        %vm1362 = vweird.f32 %v1335
        %vm1363 = vweird.f32 %v1357
        %vm1364 = vmor %vm1362, %vm1363
        %v1365 = vsel %vm1364, %v1357, %v1361
        %v1366 = vand.u32 2147483647, %v1335
        %vm1367 = vcmp.eq.f32.partialorder %v1366, 8.507059e+37
        %v1368 = vand.u32 %v1335, 2147483648
        %v1369 = vor.u32 1.1754944e-38, %v1368
        %v1370 = vsel %vm1367, %v1369, %v1365
        %v1371 = vmul.f32 %v1325, %v1370
        %v1372 = vrcp.pop %v1338
        %v1373 = vmul.f32 %v1338, %v1372
        %v1374 = vsub.f32 1.0, %v1373
        %v1375 = vmul.f32 %v1372, %v1374
        %v1376 = vadd.f32 %v1372, %v1375
        %vm1377 = vweird.f32 %v1338
        %vm1378 = vweird.f32 %v1372
        %vm1379 = vmor %vm1377, %vm1378
        %v1380 = vsel %vm1379, %v1372, %v1376
        %v1381 = vand.u32 2147483647, %v1338
        %vm1382 = vcmp.eq.f32.partialorder %v1381, 8.507059e+37
        %v1383 = vand.u32 %v1338, 2147483648
        %v1384 = vor.u32 1.1754944e-38, %v1383
        %v1385 = vsel %vm1382, %v1384, %v1380
        %v1386 = vmul.f32 %v1327, %v1385
        %v1387 = vrcp.pop %v1341
        %v1388 = vmul.f32 %v1341, %v1387
        %v1389 = vsub.f32 1.0, %v1388
        %v1390 = vmul.f32 %v1387, %v1389
        %v1391 = vadd.f32 %v1387, %v1390
        %vm1392 = vweird.f32 %v1341
        %vm1393 = vweird.f32 %v1387
        %vm1394 = vmor %vm1392, %vm1393
        %v1395 = vsel %vm1394, %v1387, %v1391
        %v1396 = vand.u32 2147483647, %v1341
        %vm1397 = vcmp.eq.f32.partialorder %v1396, 8.507059e+37
        %v1398 = vand.u32 %v1341, 2147483648
        %v1399 = vor.u32 1.1754944e-38, %v1398
        %v1400 = vsel %vm1397, %v1399, %v1395
        %v1401 = vmul.f32 %v1329, %v1400
        %v1403 = vsel %vm648, %v1356, 0
        %1405 = vmatpush.msra.mxu0 0.0
        %1406 = vmatpush.msra.mxu0 0.0
        %1407 = vmatpush.msra.mxu0 0.0
        %1408 = vmatpush.msra.mxu0 0.0
        %1409 = vmatpush.msra.mxu0 0.0
        %1410 = vmatpush.msra.mxu0 0.0
        %1411 = vmatpush.msra.mxu0 0.0
        %1412 = vmatpush.msra.mxu0 0.0
        %1413 = vmatpush.msra.mxu0 0.0
        %1414 = vmatpush.msra.mxu0 0.0
        %1415 = vmatpush.msra.mxu0 0.0
        %1416 = vmatpush.msra.mxu0 0.0
        %1417 = vmatpush.msra.mxu0 0.0
        %1418 = vmatpush.msra.mxu0 0.0
        %1419 = vmatpush.msra.mxu0 0.0
        %1420 = vmatpush.msra.mxu0 %v1183
        %1421 = vmatmul.f32.gmra.mxu0 %v1403
        %v1422 = vpop.f32.mrf.mxu0
        %v1423 = vadd.f32 0.0, %v1422
        %1424 = vdwg.mxu0
        %v1426 = vsel %vm648, %v1371, 0
        %1428 = vmatpush.msra.mxu0 0.0
        %1429 = vmatpush.msra.mxu0 0.0
        %1430 = vmatpush.msra.mxu0 0.0
        %1431 = vmatpush.msra.mxu0 0.0
        %1432 = vmatpush.msra.mxu0 0.0
        %1433 = vmatpush.msra.mxu0 0.0
        %1434 = vmatpush.msra.mxu0 0.0
        %1435 = vmatpush.msra.mxu0 0.0
        %1436 = vmatpush.msra.mxu0 0.0
        %1437 = vmatpush.msra.mxu0 0.0
        %1438 = vmatpush.msra.mxu0 0.0
        %1439 = vmatpush.msra.mxu0 0.0
        %1440 = vmatpush.msra.mxu0 0.0
        %1441 = vmatpush.msra.mxu0 0.0
        %1442 = vmatpush.msra.mxu0 0.0
        %1443 = vmatpush.msra.mxu0 %v1194
        %1444 = vmatmul.f32.gmra.mxu0 %v1426
        %v1445 = vpop.f32.mrf.mxu0
        %v1446 = vadd.f32 0.0, %v1445
        %1447 = vdwg.mxu0
        %v1449 = vsel %vm648, %v1386, 0
        %1451 = vmatpush.msra.mxu0 0.0
        %1452 = vmatpush.msra.mxu0 0.0
        %1453 = vmatpush.msra.mxu0 0.0
        %1454 = vmatpush.msra.mxu0 0.0
        %1455 = vmatpush.msra.mxu0 0.0
        %1456 = vmatpush.msra.mxu0 0.0
        %1457 = vmatpush.msra.mxu0 0.0
        %1458 = vmatpush.msra.mxu0 0.0
        %1459 = vmatpush.msra.mxu0 0.0
        %1460 = vmatpush.msra.mxu0 0.0
        %1461 = vmatpush.msra.mxu0 0.0
        %1462 = vmatpush.msra.mxu0 0.0
        %1463 = vmatpush.msra.mxu0 0.0
        %1464 = vmatpush.msra.mxu0 0.0
        %1465 = vmatpush.msra.mxu0 0.0
        %1466 = vmatpush.msra.mxu0 %v1197
        %1467 = vmatmul.f32.gmra.mxu0 %v1449
        %v1468 = vpop.f32.mrf.mxu0
        %v1469 = vadd.f32 0.0, %v1468
        %1470 = vdwg.mxu0
        %v1472 = vsel %vm648, %v1401, 0
        %1474 = vmatpush.msra.mxu0 0.0
        %1475 = vmatpush.msra.mxu0 0.0
        %1476 = vmatpush.msra.mxu0 0.0
        %1477 = vmatpush.msra.mxu0 0.0
        %1478 = vmatpush.msra.mxu0 0.0
        %1479 = vmatpush.msra.mxu0 0.0
        %1480 = vmatpush.msra.mxu0 0.0
        %1481 = vmatpush.msra.mxu0 0.0
        %1482 = vmatpush.msra.mxu0 0.0
        %1483 = vmatpush.msra.mxu0 0.0
        %1484 = vmatpush.msra.mxu0 0.0
        %1485 = vmatpush.msra.mxu0 0.0
        %1486 = vmatpush.msra.mxu0 0.0
        %1487 = vmatpush.msra.mxu0 0.0
        %1488 = vmatpush.msra.mxu0 0.0
        %1489 = vmatpush.msra.mxu0 %v1200
        %1490 = vmatmul.f32.gmra.mxu0 %v1472
        %v1491 = vpop.f32.mrf.mxu0
        %v1492 = vadd.f32 0.0, %v1491
        %1493 = vdwg.mxu0
        %1495 = vrot.lane.b32.xlu0 %v1446, 8
        %v1496 = vpop.permute.xlu0 %1495
        %1499 = vrot.lane.b32.xlu0 %v1469, 16
        %v1500 = vpop.permute.xlu0 %1499
        %1503 = vrot.lane.b32.xlu0 %v1492, 24
        %v1504 = vpop.permute.xlu0 %1503
        %v1506 = vsel %vm648, %v1423, %v1496
        %v1507 = vsel %vm952, %v1506, %v1500
        %v1508 = vsel %vm954, %v1507, %v1504
        %s1509 = scalar_lea.vmem %s6, 32
        %v1510 = vld [vmem:[%s1509] sm:$0xff]
        %v1511 = vld [vmem:[%s1509 + $0x8] sm:$0xff]
        %v1512 = vld [vmem:[%s1509 + $0x10] sm:$0xff]
        %v1513 = vld [vmem:[%s1509 + $0x18] sm:$0xff]
        %s1514 = scalar_lea.vmem [#allocation4], 1
        %v1515 = vld [vmem:[%s1514] sm:$0x1]
        %v1517 = vperm.slane %v1515, 0
        %v1520 = vsel %vm574, %v1508, 0
        %1522 = vmatpush.msra.mxu0 0.0
        %1523 = vmatpush.msra.mxu0 0.0
        %1524 = vmatpush.msra.mxu0 0.0
        %1525 = vmatpush.msra.mxu0 0.0
        %1526 = vmatpush.msra.mxu0 0.0
        %1527 = vmatpush.msra.mxu0 0.0
        %1528 = vmatpush.msra.mxu0 0.0
        %1529 = vmatpush.msra.mxu0 0.0
        %1530 = vmatpush.msra.mxu0 0.0
        %1531 = vmatpush.msra.mxu0 0.0
        %1532 = vmatpush.msra.mxu0 0.0
        %1533 = vmatpush.msra.mxu0 0.0
        %1534 = vmatpush.msra.mxu0 %v1513
        %1535 = vmatpush.msra.mxu0 %v1512
        %1536 = vmatpush.msra.mxu0 %v1511
        %1537 = vmatpush.msra.mxu0 %v1510
        %1538 = vmatmul.f32.gmra.mxu0 %v1520
        %v1539 = vpop.f32.mrf.mxu0
        %v1540 = vadd.f32 %v1517, %v1539
        %1541 = vdwg.mxu0
        %s1542 = scalar_lea.vmem %s8, 2
        %v1543 = vld [vmem:[%s1542] sm:$0x3]
        %v1544 = vadd.f32 %v1117, %v1540
        %v1545 = vsel %vm574, %v1544, 0.0
        %1546 = vadd.xlane.f32.xlu0 %v1545
        %v1547 = vpop.xlane.xlu0 %1546
        %v1548 = vmul.f32 %v1547, %v998
        %v1549 = vsub.f32 %v1544, %v1548
        %v1550 = vmul.f32 %v1549, %v1549
        %v1551 = vsel %vm574, %v1550, 0.0
        %1552 = vadd.xlane.f32.xlu0 %v1551
        %v1553 = vpop.xlane.xlu0 %1552
        %v1554 = vmul.f32 %v1553, %v998
        %v1555 = vadd.f32 %v1554, 1e-05
        %v1556 = vrsqrt.pop %v1555
        %v1557 = vmul.f32 %v1556, %v1555
        %v1558 = vmul.f32 %v1557, %v1556
        %v1559 = vmul.f32 0.5, %v1558
        %v1560 = vsub.f32 1.5, %v1559
        %v1561 = vmul.f32 %v1556, %v1560
        %vm1562 = vweird.f32 %v1555
        %vm1563 = vweird.f32 %v1556
        %vm1564 = vmor %vm1562, %vm1563
        %v1565 = vsel %vm1564, %v1556, %v1561
        %v1566 = vmul.f32 %v1549, %v1565
        %v1567 = vperm.slane %v1543, 0
        %v1568 = vmul.f32 %v1566, %v1567
        %v1569 = vperm.slane %v1543, 1
        %v1570 = vadd.f32 %v1568, %v1569
        %s1571 = scalar_lea.vmem [#allocation6], 32
        %v1572 = vld [vmem:[%s1571] sm:$0xff]
        %v1573 = vld [vmem:[%s1571 + $0x8] sm:$0xff]
        %v1574 = vld [vmem:[%s1571 + $0x10] sm:$0xff]
        %v1575 = vld [vmem:[%s1571 + $0x18] sm:$0xff]
        %s1576 = scalar_lea.vmem [#allocation7], 1
        %v1577 = vld [vmem:[%s1576] sm:$0x1]
        %v1579 = vperm.slane %v1577, 0
        %v1582 = vsel %vm574, %v1570, 0
        %1584 = vmatpush.msra.mxu0 0.0
        %1585 = vmatpush.msra.mxu0 0.0
        %1586 = vmatpush.msra.mxu0 0.0
        %1587 = vmatpush.msra.mxu0 0.0
        %1588 = vmatpush.msra.mxu0 0.0
        %1589 = vmatpush.msra.mxu0 0.0
        %1590 = vmatpush.msra.mxu0 0.0
        %1591 = vmatpush.msra.mxu0 0.0
        %1592 = vmatpush.msra.mxu0 0.0
        %1593 = vmatpush.msra.mxu0 0.0
        %1594 = vmatpush.msra.mxu0 0.0
        %1595 = vmatpush.msra.mxu0 0.0
        %1596 = vmatpush.msra.mxu0 %v1575
        %1597 = vmatpush.msra.mxu0 %v1574
        %1598 = vmatpush.msra.mxu0 %v1573
        %1599 = vmatpush.msra.mxu0 %v1572
        %1600 = vmatmul.f32.gmra.mxu0 %v1582
        %v1601 = vpop.f32.mrf.mxu0
        %v1602 = vadd.f32 %v1579, %v1601
        %1603 = vdwg.mxu0
        %v1604 = vmax.f32 %v1602, 0.0
        %s1605 = scalar_lea.vmem %s11, 64
        %v1606 = vld [vmem:[%s1605] sm:$0xff]
        %v1607 = vld [vmem:[%s1605 + $0x8] sm:$0xff]
        %v1608 = vld [vmem:[%s1605 + $0x10] sm:$0xff]
        %v1609 = vld [vmem:[%s1605 + $0x18] sm:$0xff]
        %v1610 = vld [vmem:[%s1605 + $0x20] sm:$0xff]
        %v1611 = vld [vmem:[%s1605 + $0x28] sm:$0xff]
        %v1612 = vld [vmem:[%s1605 + $0x30] sm:$0xff]
        %v1613 = vld [vmem:[%s1605 + $0x38] sm:$0xff]
        %s1614 = scalar_lea.vmem [#allocation9], 1
        %v1615 = vld [vmem:[%s1614] sm:$0x1]
        %v1617 = vperm.slane %v1615, 0
        %v1620 = vsel %vm1066, %v1604, 0
        %1622 = vmatpush.msra.mxu0 0.0
        %1623 = vmatpush.msra.mxu0 0.0
        %1624 = vmatpush.msra.mxu0 0.0
        %1625 = vmatpush.msra.mxu0 0.0
        %1626 = vmatpush.msra.mxu0 0.0
        %1627 = vmatpush.msra.mxu0 0.0
        %1628 = vmatpush.msra.mxu0 0.0
        %1629 = vmatpush.msra.mxu0 0.0
        %1630 = vmatpush.msra.mxu0 %v1613
        %1631 = vmatpush.msra.mxu0 %v1612
        %1632 = vmatpush.msra.mxu0 %v1611
        %1633 = vmatpush.msra.mxu0 %v1610
        %1634 = vmatpush.msra.mxu0 %v1609
        %1635 = vmatpush.msra.mxu0 %v1608
        %1636 = vmatpush.msra.mxu0 %v1607
        %1637 = vmatpush.msra.mxu0 %v1606
        %1638 = vmatmul.f32.gmra.mxu0 %v1620
        %v1639 = vpop.f32.mrf.mxu0
        %v1640 = vadd.f32 %v1617, %v1639
        %1641 = vdwg.mxu0
        %s1642 = scalar_lea.vmem %s13, 2
        %v1643 = vld [vmem:[%s1642] sm:$0x3]
        %v1644 = vadd.f32 %v1570, %v1640
        %v1645 = vsel %vm574, %v1644, 0.0
        %1646 = vadd.xlane.f32.xlu0 %v1645
        %v1647 = vpop.xlane.xlu0 %1646
        %v1648 = vmul.f32 %v1647, %v998
        %v1649 = vsub.f32 %v1644, %v1648
        %v1650 = vmul.f32 %v1649, %v1649
        %v1651 = vsel %vm574, %v1650, 0.0
        %1652 = vadd.xlane.f32.xlu0 %v1651
        %v1653 = vpop.xlane.xlu0 %1652
        %v1654 = vmul.f32 %v1653, %v998
        %v1655 = vadd.f32 %v1654, 1e-05
        %v1656 = vrsqrt.pop %v1655
        %v1657 = vmul.f32 %v1656, %v1655
        %v1658 = vmul.f32 %v1657, %v1656
        %v1659 = vmul.f32 0.5, %v1658
        %v1660 = vsub.f32 1.5, %v1659
        %v1661 = vmul.f32 %v1656, %v1660
        %vm1662 = vweird.f32 %v1655
        %vm1663 = vweird.f32 %v1656
        %vm1664 = vmor %vm1662, %vm1663
        %v1665 = vsel %vm1664, %v1656, %v1661
        %v1666 = vmul.f32 %v1649, %v1665
        %v1667 = vperm.slane %v1643, 0
        %v1668 = vmul.f32 %v1666, %v1667
        %v1669 = vperm.slane %v1643, 1
        %v1670 = vadd.f32 %v1668, %v1669
        %1671 = vst.msk [vmem:[%s562] sm:$0xff] %vm574, %v1670
        %p1672 = scmp.lt.s32.totalorder %s28, 1
        %s1673 = scalar_select %p1672, %s28, 1
        %s1674 = smul.addr %s1673, 8
        %s1675 = scalar_lea.vmem %s14, %s1674
        // Predicated region
        $region97: #{transformer_encoder.1} parent=75 // pred_check
          %p1676 = pneg %p350
        $region98: #{transformer_encoder.1} parent=75 // pred_check_branch
          %1678 = sbr.rel (%p1676) target = $region100
        $region99: #{transformer_encoder.1} parent=75 // pred_region
          _
        $region100: #{transformer_encoder.1} parent=75 // pred_fallthru
          _
      $region76: #{transformer_encoder.1} parent=5 // pred_fallthru
        _
      %p1679 = scmp.le.s32.totalorder 2, %s23
      // Predicated region
      $region101: #{transformer_encoder.1} parent=5 // pred_check
        %p1680 = pneg %p1679
      $region102: #{transformer_encoder.1} parent=5 // pred_check_branch
        %1682 = sbr.rel (%p1680) target = $region104
      $region103: #{transformer_encoder.1} parent=5 // pred_region
        %s1683 = ssub.s32 %s23, 2
        // Predicated region
        $region105: #{transformer_encoder.1} parent=103 // pred_check
          %p1684 = pneg %p356
        $region106: #{transformer_encoder.1} parent=103 // pred_check_branch
          %1686 = sbr.rel (%p1684) target = $region108
        $region107: #{transformer_encoder.1} parent=103 // pred_region
          %p1687 = scmp.lt.s32.totalorder %s29, 1
          %s1688 = scalar_select %p1687, %s29, 1
          %s1689 = smul.addr %s1688, 8
          %s1690 = scalar_lea.vmem %s14, %s1689
        $region108: #{transformer_encoder.1} parent=103 // pred_fallthru
          _
      $region104: #{transformer_encoder.1} parent=5 // pred_fallthru
        _
    $region6: #{transformer_encoder.1} parent=1 // loop_footer
      %s27 = sadd.s32 1, %s23
    $region7: #{transformer_encoder.1} parent=1 // loop_footer_branch
      %22 = sbr.rel target = $region3
    $region8: #{transformer_encoder.1} parent=1 // loop_exit
      _
    %1691 = vsyncpa [#allocation3], 1
    %s1692 = scalar_lea.sflag [#allocation3], 1
    %1693 = vsyncpa %s1692, 1
    %1694 = vsyncpa [#allocation5], 1
    %1695 = vsyncpa [#allocation8], 1

</llo_original>
